<compile_context>
chip_gen: v6e
topology: v6e:2x2x1
jax: 0.10.0
libtpu: 0.0.40
codegen_flags: <defaults>
</compile_context>

<pallas_src>
import functools

import jax
import jax.numpy as jnp
from jax.experimental import pallas as pl
from jax.experimental.pallas import tpu as pltpu

IMG_SIZE = 2          # 2D ring example: each "img" is a 2D point
H1, H2, OUT = 512, 256, 1
LEAKY_SLOPE = 0.2


def _round_up(x, m):
    return (x + m - 1) // m * m


def _leaky_relu(x, slope=LEAKY_SLOPE):
    # Valid because slope < 1:  max(x, slope*x) == where(x > 0, x, slope*x).
    return jnp.maximum(x, slope * x)


def disc_kernel(xa_ref, w1b1_ref, w2t_ref, b2_ref, w3_ref, b3_ref, o_ref):
    """One batch tile of the MLP, transposed layout (batch in the lane dim).

    xa_ref  : (D+1, TB) f32   input^T with a ones-row appended (bias trick)
    w1b1_ref: (H1, D+1) f32   [W1^T | b1]
    w2t_ref : (H2, H1)  f32   W2^T
    b2_ref  : (H2, 1)   f32
    w3_ref  : (1, H2)   f32   W3^T as a row
    b3_ref  : (1, 1)    f32
    o_ref   : (1, TB)   f32   lane-dense output row
    """
    # ---- Layer 1: Linear(d_in -> H1), bias fused into the MXU matmul. ----
    h1 = jnp.dot(w1b1_ref[...], xa_ref[...],
                 preferred_element_type=jnp.float32)        # (H1, TB)
    h1 = _leaky_relu(h1)

    # ---- Layer 2: Linear(H1 -> H2) on the MXU, bias + LeakyReLU on the VPU. ----
    h2 = jnp.dot(w2t_ref[...], h1,
                 preferred_element_type=jnp.float32)        # (H2, TB)
    h2 = _leaky_relu(h2 + b2_ref[...])

    # ---- Layer 3: Linear(H2 -> 1) as a (1,H2)@(H2,TB) MXU matmul. ----
    logit = jnp.dot(w3_ref[...], h2,
                    preferred_element_type=jnp.float32) + b3_ref[...]  # (1, TB)

    # ---- Sigmoid (exact; output stays strictly within [0, 1]). ----
    o_ref[...] = (1.0 / (1.0 + jnp.exp(-logit))).astype(o_ref.dtype)


@functools.partial(jax.jit, static_argnames=("block_b",))
def discriminator_forward(img, params, block_b=2048):
    w1, b1, w2, b2, w3, b3 = params
    B, D = img.shape
    h1_f, h2_f, out_f = w1.shape[1], w2.shape[1], w3.shape[1]

    # Batch tile (lane dim): multiple of 128, no larger than needed, capped at
    # 2048 so activations fit comfortably in scoped VMEM on all generations
    # (v7x only has 64 MiB physical VMEM).
    bb = _round_up(min(block_b, _round_up(B, 128)), 128)
    bb = min(bb, 2048)
    b_pad = _round_up(B, bb)
    n_tiles = b_pad // bb                                   # == pl.cdiv(b_pad, bb)

    # Features-first operands: batch lives in the lane dimension everywhere.
    # Append a ones-row to x^T so layer-1's bias is folded into its matmul
    # (K padded 2 -> 3; the MXU pads K anyway, so this is free).
    x_t = jnp.pad(img.astype(jnp.float32).T, ((0, 0), (0, b_pad - B)))  # (D, b_pad)
    x_aug = jnp.concatenate([x_t, jnp.ones((1, b_pad), jnp.float32)], axis=0)

    w1b1 = jnp.concatenate(
        [w1.T.astype(jnp.float32), b1.reshape(h1_f, 1).astype(jnp.float32)],
        axis=1)                                             # (H1, D+1)
    w2t = w2.T.astype(jnp.float32)                          # (H2, H1)
    b2c = b2.reshape(h2_f, 1).astype(jnp.float32)           # (H2, 1)
    w3r = w3.T.astype(jnp.float32).reshape(out_f, h2_f)     # (1, H2)
    b3c = b3.reshape(out_f, out_f).astype(jnp.float32)      # (1, 1)

    # Weights/biases are small and constant per step: give every step the
    # full tensor (constant index_map -> no re-DMA across grid steps).
    full = lambda arr: pl.BlockSpec(arr.shape, lambda i: (0, 0))

    flops = 2 * b_pad * ((D + 1) * h1_f + h1_f * h2_f + h2_f * out_f)
    bytes_accessed = 4 * (x_aug.size + w1b1.size + w2t.size + b2c.size +
                          w3r.size + b3c.size + b_pad)

    out_row = pl.pallas_call(
        disc_kernel,
        out_shape=jax.ShapeDtypeStruct((1, b_pad), jnp.float32),
        grid_spec=pltpu.PrefetchScalarGridSpec(
            num_scalar_prefetch=0,
            grid=(n_tiles,),
            in_specs=[
                pl.BlockSpec((D + 1, bb), lambda i: (0, i)),  # x tile (batch in lanes)
                full(w1b1),
                full(w2t), full(b2c),
                full(w3r), full(b3c),
            ],
            out_specs=pl.BlockSpec((1, bb), lambda i: (0, i)),  # lane-dense output
        ),
        compiler_params=pltpu.CompilerParams(
            dimension_semantics=("parallel",)),
        cost_estimate=pl.CostEstimate(
            flops=flops, transcendentals=b_pad,
            bytes_accessed=bytes_accessed),
    )(x_aug, w1b1, w2t, b2c, w3r, b3c)

    # Back to the module's (B, 1) "validity" layout (cheap XLA reshape/slice).
    return out_row[0, :B].reshape(B, out_f)


def init_params(key):
    # Deterministic init mimicking PyTorch Linear default: U(-1/sqrt(fan_in), +)
    def linear(key, fan_in, fan_out):
        kw, kb = jax.random.split(key)
        bound = 1.0 / jnp.sqrt(fan_in)
        w = jax.random.uniform(kw, (fan_in, fan_out), jnp.float32, -bound, bound)
        b = jax.random.uniform(kb, (1, fan_out), jnp.float32, -bound, bound)
        return w, b

    k1, k2, k3 = jax.random.split(key, 3)
    w1, b1 = linear(k1, IMG_SIZE, H1)
    w2, b2 = linear(k2, H1, H2)
    w3, b3 = linear(k3, H2, OUT)
    return (w1, b1, w2, b2, w3, b3)


def reference_forward(img, params):
    w1, b1, w2, b2, w3, b3 = params
    h1 = jnp.where(img @ w1 + b1 > 0, img @ w1 + b1, LEAKY_SLOPE * (img @ w1 + b1))
    h2 = jnp.where(h1 @ w2 + b2 > 0, h1 @ w2 + b2, LEAKY_SLOPE * (h1 @ w2 + b2))
    return jax.nn.sigmoid(h2 @ w3 + b3)


if __name__ == "__main__":
    key = jax.random.PRNGKey(0)
    kp, kx = jax.random.split(key)

    params = init_params(kp)
    batch = 128
    img = jax.random.normal(kx, (batch, IMG_SIZE), jnp.float32)

    out = discriminator_forward(img, params)
    out = jax.block_until_ready(out)

    ref = reference_forward(img, params)
    assert out.shape == (batch, OUT)
    # Kernel is now all-f32 with an exact sigmoid; differences vs the plain
    # JAX reference come only from matmul accumulation order / MXU precision.
    assert jnp.allclose(out, ref, atol=2e-3, rtol=2e-3), "mismatch vs reference"

    print("KERNEL_OK")
</pallas_src>

<mosaic_0001>
module attributes {stable_mosaic.version = 11 : i64} {
  func.func @disc_kernel(%arg0: i32, %arg1: memref<3x128xf32, #tpu.memory_space<vmem>>, %arg2: memref<512x3xf32, #tpu.memory_space<vmem>>, %arg3: memref<256x512xf32, #tpu.memory_space<vmem>>, %arg4: memref<256x1xf32, #tpu.memory_space<vmem>>, %arg5: memref<1x256xf32, #tpu.memory_space<vmem>>, %arg6: memref<1x1xf32, #tpu.memory_space<vmem>>, %arg7: memref<1x128xf32, #tpu.memory_space<vmem>>) attributes {dimension_semantics = [#tpu.dimension_semantics<parallel>], iteration_bounds = array<i64: 1>, scalar_prefetch = 0 : i64, scratch_operands = 0 : i64, tpu.core_type = #tpu.core_type<tc>, window_params = [{transform_indices = @transform_0, window_bounds = array<i64: 3, 128>}, {pipeline_mode = #tpu.pipeline_mode<synchronous>, transform_indices = @transform_1, window_bounds = array<i64: 512, 3>}, {pipeline_mode = #tpu.pipeline_mode<synchronous>, transform_indices = @transform_2, window_bounds = array<i64: 256, 512>}, {pipeline_mode = #tpu.pipeline_mode<synchronous>, transform_indices = @transform_3, window_bounds = array<i64: 256, 1>}, {pipeline_mode = #tpu.pipeline_mode<synchronous>, transform_indices = @transform_4, window_bounds = array<i64: 1, 256>}, {pipeline_mode = #tpu.pipeline_mode<synchronous>, transform_indices = @transform_5, window_bounds = array<i64: 1, 1>}, {transform_indices = @transform_6, window_bounds = array<i64: 1, 128>}]} {
    %c0 = arith.constant 0 : index
    %c0_0 = arith.constant 0 : index
    %0 = vector.load %arg2[%c0, %c0_0] : memref<512x3xf32, #tpu.memory_space<vmem>>, vector<512x3xf32>
    %c0_1 = arith.constant 0 : index
    %c0_2 = arith.constant 0 : index
    %1 = vector.load %arg1[%c0_1, %c0_2] : memref<3x128xf32, #tpu.memory_space<vmem>>, vector<3x128xf32>
    %cst = arith.constant dense<0.000000e+00> : vector<512x128xf32>
    %2 = tpu.matmul %0, %1, %cst {dimension_numbers = #tpu.dot_dimension_numbers<[1], [0], [0], [1], [0, 0, 1, 1], [], []>} : vector<512x3xf32>, vector<3x128xf32>, vector<512x128xf32> -> vector<512x128xf32>
    %cst_3 = arith.constant 2.000000e-01 : f32
    %3 = vector.broadcast %cst_3 : f32 to vector<512x128xf32>
    %4 = arith.mulf %3, %2 : vector<512x128xf32>
    %5 = arith.maximumf %2, %4 : vector<512x128xf32>
    %c0_4 = arith.constant 0 : index
    %c0_5 = arith.constant 0 : index
    %6 = vector.load %arg3[%c0_4, %c0_5] : memref<256x512xf32, #tpu.memory_space<vmem>>, vector<256x512xf32>
    %cst_6 = arith.constant dense<0.000000e+00> : vector<256x128xf32>
    %7 = tpu.matmul %6, %5, %cst_6 {dimension_numbers = #tpu.dot_dimension_numbers<[1], [0], [0], [1], [0, 0, 1, 1], [], []>} : vector<256x512xf32>, vector<512x128xf32>, vector<256x128xf32> -> vector<256x128xf32>
    %c0_7 = arith.constant 0 : index
    %c0_8 = arith.constant 0 : index
    %8 = vector.load %arg4[%c0_7, %c0_8] : memref<256x1xf32, #tpu.memory_space<vmem>>, vector<256x1xf32>
    %9 = vector.broadcast %8 : vector<256x1xf32> to vector<256x128xf32>
    %10 = arith.addf %7, %9 : vector<256x128xf32>
    %cst_9 = arith.constant 2.000000e-01 : f32
    %11 = vector.broadcast %cst_9 : f32 to vector<256x128xf32>
    %12 = arith.mulf %11, %10 : vector<256x128xf32>
    %13 = arith.maximumf %10, %12 : vector<256x128xf32>
    %c0_10 = arith.constant 0 : index
    %c0_11 = arith.constant 0 : index
    %14 = vector.load %arg5[%c0_10, %c0_11] : memref<1x256xf32, #tpu.memory_space<vmem>>, vector<1x256xf32>
    %cst_12 = arith.constant dense<0.000000e+00> : vector<1x128xf32>
    %15 = tpu.matmul %14, %13, %cst_12 {dimension_numbers = #tpu.dot_dimension_numbers<[1], [0], [0], [1], [0, 0, 1, 1], [], []>} : vector<1x256xf32>, vector<256x128xf32>, vector<1x128xf32> -> vector<1x128xf32>
    %c0_13 = arith.constant 0 : index
    %c0_14 = arith.constant 0 : index
    %16 = vector.load %arg6[%c0_13, %c0_14] : memref<1x1xf32, #tpu.memory_space<vmem>>, vector<1x1xf32>
    %17 = vector.broadcast %16 : vector<1x1xf32> to vector<1x128xf32>
    %18 = arith.addf %15, %17 : vector<1x128xf32>
    %cst_15 = arith.constant 0.000000e+00 : f32
    %19 = vector.broadcast %cst_15 : f32 to vector<1x128xf32>
    %20 = arith.subf %19, %18 : vector<1x128xf32>
    %21 = math.exp %20 : vector<1x128xf32>
    %cst_16 = arith.constant 1.000000e+00 : f32
    %22 = vector.broadcast %cst_16 : f32 to vector<1x128xf32>
    %23 = arith.addf %22, %21 : vector<1x128xf32>
    %cst_17 = arith.constant 1.000000e+00 : f32
    %24 = vector.broadcast %cst_17 : f32 to vector<1x128xf32>
    %25 = arith.divf %24, %23 : vector<1x128xf32>
    %c0_18 = arith.constant 0 : index
    %c0_19 = arith.constant 0 : index
    %26 = vector.load %arg7[%c0_18, %c0_19] : memref<1x128xf32, #tpu.memory_space<vmem>>, vector<1x128xf32>
    tpu.vector_store %arg7[%c0_18, %c0_19], %25 {strides = array<i32>} : memref<1x128xf32, #tpu.memory_space<vmem>>, vector<1x128xf32>,
    return
  }
  func.func @transform_0(%arg0: i32) -> (i32, i32) {
    %c0_i32 = arith.constant 0 : i32
    %c0_i32_0 = arith.constant 0 : i32
    return %c0_i32, %arg0 : i32, i32
  }
  func.func @transform_1(%arg0: i32) -> (i32, i32) {
    %c0_i32 = arith.constant 0 : i32
    %c0_i32_0 = arith.constant 0 : i32
    %c0_i32_1 = arith.constant 0 : i32
    return %c0_i32, %c0_i32_0 : i32, i32
  }
  func.func @transform_2(%arg0: i32) -> (i32, i32) {
    %c0_i32 = arith.constant 0 : i32
    %c0_i32_0 = arith.constant 0 : i32
    %c0_i32_1 = arith.constant 0 : i32
    return %c0_i32, %c0_i32_0 : i32, i32
  }
  func.func @transform_3(%arg0: i32) -> (i32, i32) {
    %c0_i32 = arith.constant 0 : i32
    %c0_i32_0 = arith.constant 0 : i32
    %c0_i32_1 = arith.constant 0 : i32
    return %c0_i32, %c0_i32_0 : i32, i32
  }
  func.func @transform_4(%arg0: i32) -> (i32, i32) {
    %c0_i32 = arith.constant 0 : i32
    %c0_i32_0 = arith.constant 0 : i32
    %c0_i32_1 = arith.constant 0 : i32
    return %c0_i32, %c0_i32_0 : i32, i32
  }
  func.func @transform_5(%arg0: i32) -> (i32, i32) {
    %c0_i32 = arith.constant 0 : i32
    %c0_i32_0 = arith.constant 0 : i32
    %c0_i32_1 = arith.constant 0 : i32
    return %c0_i32, %c0_i32_0 : i32, i32
  }
  func.func @transform_6(%arg0: i32) -> (i32, i32) {
    %c0_i32 = arith.constant 0 : i32
    %c0_i32_0 = arith.constant 0 : i32
    return %c0_i32, %arg0 : i32, i32
  }
}

</mosaic_0001>

<llo_original>
// kernel: discriminator_forward.1
$region0: #{discriminator_forward.1}
  #allocation0 [shape = 'u32[]', space=smem, size = 0x4, offset = 0x4, fixed_abs, tag = 'smem constant byte address 0x4 - core index']
  #allocation1 [shape = 'u32[144,128]{1,0:T(1,128)}', space=vmem, size = 0x12000, scoped, tag = 'internal scratch']
  #allocation2 [shape = 'f32[1,1]{1,0:T(1,128)S(1)}', space=vmem, size = 0x200, scoped, tag = 'scoped memory for discriminator_forward.1']
  %s0 = inlined_call_operand.vmem [shape: f32[3,128], index: 0, kind: input, shape index: {}]
  %s1 = inlined_call_operand.vmem [shape: f32[512,3], index: 1, kind: input, shape index: {}]
  %s2 = inlined_call_operand.vmem [shape: f32[256,512], index: 2, kind: input, shape index: {}]
  %s3 = inlined_call_operand.vmem [shape: f32[256,1], index: 3, kind: input, shape index: {}]
  %s4 = inlined_call_operand.vmem [shape: f32[1,256], index: 4, kind: input, shape index: {}]
  %s5 = inlined_call_operand.<no memory space> [shape: f32[1,1], index: 5, kind: input, shape index: {}]
  %s6 = inlined_call_operand.hbm [shape: f32[1,128], index: 6, kind: output, shape index: {}]
  %s7 = sld [smem:[#allocation0]]
  $region34: #{discriminator_forward.1} parent=0
    _
  %s9 = ssub.s32 1, %s7
  %s10 = scalar_select 0, %s9, %s7
  %v11 = vstv %s5
  %12 = vst [vmem:[#allocation2] sm:$0x1] %v11
  $region1: #{discriminator_forward.1} parent=0
    #allocation3 [shape = 'u8[512]{0}', space=vmem, size = 0x400, scoped, tag = 'output window, operand 0, single buffered']
    #allocation4 [shape = 's32[1]{0}', space=sflag, size = 0x4, scoped, tag = 'scoped memory for discriminator_forward.1']
    %13 = vsyncpa [#allocation4], 0
    // Predicated region
    $region2: #{discriminator_forward.1} parent=1 // pred_check
      _
    $region3: #{discriminator_forward.1} parent=1 // pred_check_branch
      %15 = sbr.rel (0) target = $region5
    $region4: #{discriminator_forward.1} parent=1 // pred_region
      _
    $region5: #{discriminator_forward.1} parent=1 // pred_fallthru
      _
    // Predicated region
    $region6: #{discriminator_forward.1} parent=1 // pred_check
      _
    $region7: #{discriminator_forward.1} parent=1 // pred_check_branch
      %17 = sbr.rel (0) target = $region9
    $region8: #{discriminator_forward.1} parent=1 // pred_region
      _
    $region9: #{discriminator_forward.1} parent=1 // pred_fallthru
      _
    // Predicated region
    $region10: #{discriminator_forward.1} parent=1 // pred_check
      _
    $region11: #{discriminator_forward.1} parent=1 // pred_check_branch
      %19 = sbr.rel (0) target = $region13
    $region12: #{discriminator_forward.1} parent=1 // pred_region
      _
    $region13: #{discriminator_forward.1} parent=1 // pred_fallthru
      _
    // Predicated region
    $region14: #{discriminator_forward.1} parent=1 // pred_check
      _
    $region15: #{discriminator_forward.1} parent=1 // pred_check_branch
      %21 = sbr.rel (0) target = $region17
    $region16: #{discriminator_forward.1} parent=1 // pred_region
      _
    $region17: #{discriminator_forward.1} parent=1 // pred_fallthru
      _
    // Predicated region
    $region18: #{discriminator_forward.1} parent=1 // pred_check
      _
    $region19: #{discriminator_forward.1} parent=1 // pred_check_branch
      %23 = sbr.rel (0) target = $region21
    $region20: #{discriminator_forward.1} parent=1 // pred_region
      _
    $region21: #{discriminator_forward.1} parent=1 // pred_fallthru
      _
    // Predicated region
    $region22: #{discriminator_forward.1} parent=1 // pred_check
      _
    $region23: #{discriminator_forward.1} parent=1 // pred_check_branch
      %25 = sbr.rel (0) target = $region25
    $region24: #{discriminator_forward.1} parent=1 // pred_region
      _
    $region25: #{discriminator_forward.1} parent=1 // pred_fallthru
      _
    %v26 = vld [vmem:[%s1] sm:$0xff]
    %v27 = vld [vmem:[%s1 + $0x8] sm:$0xff]
    %v28 = vld [vmem:[%s1 + $0x10] sm:$0xff]
    %v29 = vld [vmem:[%s1 + $0x18] sm:$0xff]
    %v30 = vld [vmem:[%s1 + $0x20] sm:$0xff]
    %v31 = vld [vmem:[%s1 + $0x28] sm:$0xff]
    %v32 = vld [vmem:[%s1 + $0x30] sm:$0xff]
    %v33 = vld [vmem:[%s1 + $0x38] sm:$0xff]
    %v34 = vld [vmem:[%s1 + $0x40] sm:$0xff]
    %v35 = vld [vmem:[%s1 + $0x48] sm:$0xff]
    %v36 = vld [vmem:[%s1 + $0x50] sm:$0xff]
    %v37 = vld [vmem:[%s1 + $0x58] sm:$0xff]
    %v38 = vld [vmem:[%s1 + $0x60] sm:$0xff]
    %v39 = vld [vmem:[%s1 + $0x68] sm:$0xff]
    %v40 = vld [vmem:[%s1 + $0x70] sm:$0xff]
    %v41 = vld [vmem:[%s1 + $0x78] sm:$0xff]
    %v42 = vld [vmem:[%s1 + $0x80] sm:$0xff]
    %v43 = vld [vmem:[%s1 + $0x88] sm:$0xff]
    %v44 = vld [vmem:[%s1 + $0x90] sm:$0xff]
    %v45 = vld [vmem:[%s1 + $0x98] sm:$0xff]
    %v46 = vld [vmem:[%s1 + $0xa0] sm:$0xff]
    %v47 = vld [vmem:[%s1 + $0xa8] sm:$0xff]
    %v48 = vld [vmem:[%s1 + $0xb0] sm:$0xff]
    %v49 = vld [vmem:[%s1 + $0xb8] sm:$0xff]
    %v50 = vld [vmem:[%s1 + $0xc0] sm:$0xff]
    %v51 = vld [vmem:[%s1 + $0xc8] sm:$0xff]
    %v52 = vld [vmem:[%s1 + $0xd0] sm:$0xff]
    %v53 = vld [vmem:[%s1 + $0xd8] sm:$0xff]
    %v54 = vld [vmem:[%s1 + $0xe0] sm:$0xff]
    %v55 = vld [vmem:[%s1 + $0xe8] sm:$0xff]
    %v56 = vld [vmem:[%s1 + $0xf0] sm:$0xff]
    %v57 = vld [vmem:[%s1 + $0xf8] sm:$0xff]
    %v58 = vld [vmem:[%s1 + $0x100] sm:$0xff]
    %v59 = vld [vmem:[%s1 + $0x108] sm:$0xff]
    %v60 = vld [vmem:[%s1 + $0x110] sm:$0xff]
    %v61 = vld [vmem:[%s1 + $0x118] sm:$0xff]
    %v62 = vld [vmem:[%s1 + $0x120] sm:$0xff]
    %v63 = vld [vmem:[%s1 + $0x128] sm:$0xff]
    %v64 = vld [vmem:[%s1 + $0x130] sm:$0xff]
    %v65 = vld [vmem:[%s1 + $0x138] sm:$0xff]
    %v66 = vld [vmem:[%s1 + $0x140] sm:$0xff]
    %v67 = vld [vmem:[%s1 + $0x148] sm:$0xff]
    %v68 = vld [vmem:[%s1 + $0x150] sm:$0xff]
    %v69 = vld [vmem:[%s1 + $0x158] sm:$0xff]
    %v70 = vld [vmem:[%s1 + $0x160] sm:$0xff]
    %v71 = vld [vmem:[%s1 + $0x168] sm:$0xff]
    %v72 = vld [vmem:[%s1 + $0x170] sm:$0xff]
    %v73 = vld [vmem:[%s1 + $0x178] sm:$0xff]
    %v74 = vld [vmem:[%s1 + $0x180] sm:$0xff]
    %v75 = vld [vmem:[%s1 + $0x188] sm:$0xff]
    %v76 = vld [vmem:[%s1 + $0x190] sm:$0xff]
    %v77 = vld [vmem:[%s1 + $0x198] sm:$0xff]
    %v78 = vld [vmem:[%s1 + $0x1a0] sm:$0xff]
    %v79 = vld [vmem:[%s1 + $0x1a8] sm:$0xff]
    %v80 = vld [vmem:[%s1 + $0x1b0] sm:$0xff]
    %v81 = vld [vmem:[%s1 + $0x1b8] sm:$0xff]
    %v82 = vld [vmem:[%s1 + $0x1c0] sm:$0xff]
    %v83 = vld [vmem:[%s1 + $0x1c8] sm:$0xff]
    %v84 = vld [vmem:[%s1 + $0x1d0] sm:$0xff]
    %v85 = vld [vmem:[%s1 + $0x1d8] sm:$0xff]
    %v86 = vld [vmem:[%s1 + $0x1e0] sm:$0xff]
    %v87 = vld [vmem:[%s1 + $0x1e8] sm:$0xff]
    %v88 = vld [vmem:[%s1 + $0x1f0] sm:$0xff]
    %v89 = vld [vmem:[%s1 + $0x1f8] sm:$0xff]
    %v90 = vld [vmem:[%s0] sm:$0x7]
    %vm91 = vcmask 23552
    %v93 = vsel %vm91, %v26, 0
    %v96 = vsel %vm91, %v27, 0
    %v99 = vsel %vm91, %v28, 0
    %v102 = vsel %vm91, %v29, 0
    %v105 = vsel %vm91, %v30, 0
    %v108 = vsel %vm91, %v31, 0
    %v111 = vsel %vm91, %v32, 0
    %v114 = vsel %vm91, %v33, 0
    %v117 = vsel %vm91, %v34, 0
    %v120 = vsel %vm91, %v35, 0
    %v123 = vsel %vm91, %v36, 0
    %v126 = vsel %vm91, %v37, 0
    %v129 = vsel %vm91, %v38, 0
    %v132 = vsel %vm91, %v39, 0
    %v135 = vsel %vm91, %v40, 0
    %v138 = vsel %vm91, %v41, 0
    %v141 = vsel %vm91, %v42, 0
    %v144 = vsel %vm91, %v43, 0
    %v147 = vsel %vm91, %v44, 0
    %v150 = vsel %vm91, %v45, 0
    %v153 = vsel %vm91, %v46, 0
    %v156 = vsel %vm91, %v47, 0
    %v159 = vsel %vm91, %v48, 0
    %v162 = vsel %vm91, %v49, 0
    %v165 = vsel %vm91, %v50, 0
    %v168 = vsel %vm91, %v51, 0
    %v171 = vsel %vm91, %v52, 0
    %v174 = vsel %vm91, %v53, 0
    %v177 = vsel %vm91, %v54, 0
    %v180 = vsel %vm91, %v55, 0
    %v183 = vsel %vm91, %v56, 0
    %v186 = vsel %vm91, %v57, 0
    %v189 = vsel %vm91, %v58, 0
    %v192 = vsel %vm91, %v59, 0
    %v195 = vsel %vm91, %v60, 0
    %v198 = vsel %vm91, %v61, 0
    %v201 = vsel %vm91, %v62, 0
    %v204 = vsel %vm91, %v63, 0
    %v207 = vsel %vm91, %v64, 0
    %v210 = vsel %vm91, %v65, 0
    %v213 = vsel %vm91, %v66, 0
    %v216 = vsel %vm91, %v67, 0
    %v219 = vsel %vm91, %v68, 0
    %v222 = vsel %vm91, %v69, 0
    %v225 = vsel %vm91, %v70, 0
    %v228 = vsel %vm91, %v71, 0
    %v231 = vsel %vm91, %v72, 0
    %v234 = vsel %vm91, %v73, 0
    %v237 = vsel %vm91, %v74, 0
    %v240 = vsel %vm91, %v75, 0
    %v243 = vsel %vm91, %v76, 0
    %v246 = vsel %vm91, %v77, 0
    %v249 = vsel %vm91, %v78, 0
    %v252 = vsel %vm91, %v79, 0
    %v255 = vsel %vm91, %v80, 0
    %v258 = vsel %vm91, %v81, 0
    %v261 = vsel %vm91, %v82, 0
    %v264 = vsel %vm91, %v83, 0
    %v267 = vsel %vm91, %v84, 0
    %v270 = vsel %vm91, %v85, 0
    %v273 = vsel %vm91, %v86, 0
    %v276 = vsel %vm91, %v87, 0
    %v279 = vsel %vm91, %v88, 0
    %v282 = vsel %vm91, %v89, 0
    %vm284 = vcmask 1042432
    %v286 = vsel %vm284, %v90, 0
    %288 = vmatprep.subr.mxu0 0.0
    %289 = vmatpush1.msra.mxu0 0.0
    %290 = vmatprep.subr.mxu0 0.0
    %291 = vmatpush1.msra.mxu0 0.0
    %292 = vmatprep.subr.mxu0 0.0
    %293 = vmatpush1.msra.mxu0 0.0
    %294 = vmatprep.subr.mxu0 0.0
    %295 = vmatpush1.msra.mxu0 0.0
    %296 = vmatprep.subr.mxu0 0.0
    %297 = vmatpush1.msra.mxu0 0.0
    %298 = vmatprep.subr.mxu0 0.0
    %299 = vmatpush1.msra.mxu0 0.0
    %300 = vmatprep.subr.mxu0 0.0
    %301 = vmatpush1.msra.mxu0 0.0
    %302 = vmatprep.subr.mxu0 0.0
    %303 = vmatpush1.msra.mxu0 0.0
    %304 = vmatprep.subr.mxu0 0.0
    %305 = vmatpush1.msra.mxu0 0.0
    %306 = vmatprep.subr.mxu0 0.0
    %307 = vmatpush1.msra.mxu0 0.0
    %308 = vmatprep.subr.mxu0 0.0
    %309 = vmatpush1.msra.mxu0 0.0
    %310 = vmatprep.subr.mxu0 0.0
    %311 = vmatpush1.msra.mxu0 0.0
    %312 = vmatprep.subr.mxu0 0.0
    %313 = vmatpush1.msra.mxu0 0.0
    %314 = vmatprep.subr.mxu0 0.0
    %315 = vmatpush1.msra.mxu0 0.0
    %316 = vmatprep.subr.mxu0 0.0
    %317 = vmatpush1.msra.mxu0 0.0
    %318 = vmatprep.subr.mxu0 0.0
    %319 = vmatpush1.msra.mxu0 %v286
    %320 = vmatprep.subr.mxu0 0.0
    %321 = vmatpush2.msra.mxu0 0.0
    %322 = vmatprep.subr.mxu0 0.0
    %323 = vmatpush2.msra.mxu0 0.0
    %324 = vmatprep.subr.mxu0 0.0
    %325 = vmatpush2.msra.mxu0 0.0
    %326 = vmatprep.subr.mxu0 0.0
    %327 = vmatpush2.msra.mxu0 0.0
    %328 = vmatprep.subr.mxu0 0.0
    %329 = vmatpush2.msra.mxu0 0.0
    %330 = vmatprep.subr.mxu0 0.0
    %331 = vmatpush2.msra.mxu0 0.0
    %332 = vmatprep.subr.mxu0 0.0
    %333 = vmatpush2.msra.mxu0 0.0
    %334 = vmatprep.subr.mxu0 0.0
    %335 = vmatpush2.msra.mxu0 0.0
    %336 = vmatprep.subr.mxu0 0.0
    %337 = vmatpush2.msra.mxu0 0.0
    %338 = vmatprep.subr.mxu0 0.0
    %339 = vmatpush2.msra.mxu0 0.0
    %340 = vmatprep.subr.mxu0 0.0
    %341 = vmatpush2.msra.mxu0 0.0
    %342 = vmatprep.subr.mxu0 0.0
    %343 = vmatpush2.msra.mxu0 0.0
    %344 = vmatprep.subr.mxu0 0.0
    %345 = vmatpush2.msra.mxu0 0.0
    %346 = vmatprep.subr.mxu0 0.0
    %347 = vmatpush2.msra.mxu0 0.0
    %348 = vmatprep.subr.mxu0 0.0
    %349 = vmatpush2.msra.mxu0 0.0
    %350 = vmatprep.subr.mxu0 0.0
    %351 = vmatpush2.msra.mxu0 0.0
    %352 = vmatprep.mubr.f32.mxu0 0.0
    %353 = vmatmul.mubr.f32.gmra.mxu0 %v93
    %v354 = vpop.f32.mrf.mxu0
    %v355 = vadd.f32 0.0, %v354
    %v356 = vpop.f32.mrf.mxu0
    %357 = vmatprep.mubr.f32.mxu0 0.0
    %358 = vmatmul.mubr.f32.gmra.mxu0 %v96
    %v359 = vpop.f32.mrf.mxu0
    %v360 = vadd.f32 0.0, %v359
    %v361 = vpop.f32.mrf.mxu0
    %362 = vmatprep.mubr.f32.mxu0 0.0
    %363 = vmatmul.mubr.f32.gmra.mxu0 %v99
    %v364 = vpop.f32.mrf.mxu0
    %v365 = vadd.f32 0.0, %v364
    %v366 = vpop.f32.mrf.mxu0
    %367 = vmatprep.mubr.f32.mxu0 0.0
    %368 = vmatmul.mubr.f32.gmra.mxu0 %v102
    %v369 = vpop.f32.mrf.mxu0
    %v370 = vadd.f32 0.0, %v369
    %v371 = vpop.f32.mrf.mxu0
    %372 = vmatprep.mubr.f32.mxu0 0.0
    %373 = vmatmul.mubr.f32.gmra.mxu0 %v105
    %v374 = vpop.f32.mrf.mxu0
    %v375 = vadd.f32 0.0, %v374
    %v376 = vpop.f32.mrf.mxu0
    %377 = vmatprep.mubr.f32.mxu0 0.0
    %378 = vmatmul.mubr.f32.gmra.mxu0 %v108
    %v379 = vpop.f32.mrf.mxu0
    %v380 = vadd.f32 0.0, %v379
    %v381 = vpop.f32.mrf.mxu0
    %382 = vmatprep.mubr.f32.mxu0 0.0
    %383 = vmatmul.mubr.f32.gmra.mxu0 %v111
    %v384 = vpop.f32.mrf.mxu0
    %v385 = vadd.f32 0.0, %v384
    %v386 = vpop.f32.mrf.mxu0
    %387 = vmatprep.mubr.f32.mxu0 0.0
    %388 = vmatmul.mubr.f32.gmra.mxu0 %v114
    %v389 = vpop.f32.mrf.mxu0
    %v390 = vadd.f32 0.0, %v389
    %v391 = vpop.f32.mrf.mxu0
    %392 = vmatprep.mubr.f32.mxu0 0.0
    %393 = vmatmul.mubr.f32.gmra.mxu0 %v117
    %v394 = vpop.f32.mrf.mxu0
    %v395 = vadd.f32 0.0, %v394
    %v396 = vpop.f32.mrf.mxu0
    %397 = vmatprep.mubr.f32.mxu0 0.0
    %398 = vmatmul.mubr.f32.gmra.mxu0 %v120
    %v399 = vpop.f32.mrf.mxu0
    %v400 = vadd.f32 0.0, %v399
    %v401 = vpop.f32.mrf.mxu0
    %402 = vmatprep.mubr.f32.mxu0 0.0
    %403 = vmatmul.mubr.f32.gmra.mxu0 %v123
    %v404 = vpop.f32.mrf.mxu0
    %v405 = vadd.f32 0.0, %v404
    %v406 = vpop.f32.mrf.mxu0
    %407 = vmatprep.mubr.f32.mxu0 0.0
    %408 = vmatmul.mubr.f32.gmra.mxu0 %v126
    %v409 = vpop.f32.mrf.mxu0
    %v410 = vadd.f32 0.0, %v409
    %v411 = vpop.f32.mrf.mxu0
    %412 = vmatprep.mubr.f32.mxu0 0.0
    %413 = vmatmul.mubr.f32.gmra.mxu0 %v129
    %v414 = vpop.f32.mrf.mxu0
    %v415 = vadd.f32 0.0, %v414
    %v416 = vpop.f32.mrf.mxu0
    %417 = vmatprep.mubr.f32.mxu0 0.0
    %418 = vmatmul.mubr.f32.gmra.mxu0 %v132
    %v419 = vpop.f32.mrf.mxu0
    %v420 = vadd.f32 0.0, %v419
    %v421 = vpop.f32.mrf.mxu0
    %422 = vmatprep.mubr.f32.mxu0 0.0
    %423 = vmatmul.mubr.f32.gmra.mxu0 %v135
    %v424 = vpop.f32.mrf.mxu0
    %v425 = vadd.f32 0.0, %v424
    %v426 = vpop.f32.mrf.mxu0
    %427 = vmatprep.mubr.f32.mxu0 0.0
    %428 = vmatmul.mubr.f32.gmra.mxu0 %v138
    %v429 = vpop.f32.mrf.mxu0
    %v430 = vadd.f32 0.0, %v429
    %v431 = vpop.f32.mrf.mxu0
    %432 = vmatprep.mubr.f32.mxu0 0.0
    %433 = vmatmul.mubr.f32.gmra.mxu0 %v141
    %v434 = vpop.f32.mrf.mxu0
    %v435 = vadd.f32 0.0, %v434
    %v436 = vpop.f32.mrf.mxu0
    %437 = vmatprep.mubr.f32.mxu0 0.0
    %438 = vmatmul.mubr.f32.gmra.mxu0 %v144
    %v439 = vpop.f32.mrf.mxu0
    %v440 = vadd.f32 0.0, %v439
    %v441 = vpop.f32.mrf.mxu0
    %442 = vmatprep.mubr.f32.mxu0 0.0
    %443 = vmatmul.mubr.f32.gmra.mxu0 %v147
    %v444 = vpop.f32.mrf.mxu0
    %v445 = vadd.f32 0.0, %v444
    %v446 = vpop.f32.mrf.mxu0
    %447 = vmatprep.mubr.f32.mxu0 0.0
    %448 = vmatmul.mubr.f32.gmra.mxu0 %v150
    %v449 = vpop.f32.mrf.mxu0
    %v450 = vadd.f32 0.0, %v449
    %v451 = vpop.f32.mrf.mxu0
    %452 = vmatprep.mubr.f32.mxu0 0.0
    %453 = vmatmul.mubr.f32.gmra.mxu0 %v153
    %v454 = vpop.f32.mrf.mxu0
    %v455 = vadd.f32 0.0, %v454
    %v456 = vpop.f32.mrf.mxu0
    %457 = vmatprep.mubr.f32.mxu0 0.0
    %458 = vmatmul.mubr.f32.gmra.mxu0 %v156
    %v459 = vpop.f32.mrf.mxu0
    %v460 = vadd.f32 0.0, %v459
    %v461 = vpop.f32.mrf.mxu0
    %462 = vmatprep.mubr.f32.mxu0 0.0
    %463 = vmatmul.mubr.f32.gmra.mxu0 %v159
    %v464 = vpop.f32.mrf.mxu0
    %v465 = vadd.f32 0.0, %v464
    %v466 = vpop.f32.mrf.mxu0
    %467 = vmatprep.mubr.f32.mxu0 0.0
    %468 = vmatmul.mubr.f32.gmra.mxu0 %v162
    %v469 = vpop.f32.mrf.mxu0
    %v470 = vadd.f32 0.0, %v469
    %v471 = vpop.f32.mrf.mxu0
    %472 = vmatprep.mubr.f32.mxu0 0.0
    %473 = vmatmul.mubr.f32.gmra.mxu0 %v165
    %v474 = vpop.f32.mrf.mxu0
    %v475 = vadd.f32 0.0, %v474
    %v476 = vpop.f32.mrf.mxu0
    %477 = vmatprep.mubr.f32.mxu0 0.0
    %478 = vmatmul.mubr.f32.gmra.mxu0 %v168
    %v479 = vpop.f32.mrf.mxu0
    %v480 = vadd.f32 0.0, %v479
    %v481 = vpop.f32.mrf.mxu0
    %482 = vmatprep.mubr.f32.mxu0 0.0
    %483 = vmatmul.mubr.f32.gmra.mxu0 %v171
    %v484 = vpop.f32.mrf.mxu0
    %v485 = vadd.f32 0.0, %v484
    %v486 = vpop.f32.mrf.mxu0
    %487 = vmatprep.mubr.f32.mxu0 0.0
    %488 = vmatmul.mubr.f32.gmra.mxu0 %v174
    %v489 = vpop.f32.mrf.mxu0
    %v490 = vadd.f32 0.0, %v489
    %v491 = vpop.f32.mrf.mxu0
    %492 = vmatprep.mubr.f32.mxu0 0.0
    %493 = vmatmul.mubr.f32.gmra.mxu0 %v177
    %v494 = vpop.f32.mrf.mxu0
    %v495 = vadd.f32 0.0, %v494
    %v496 = vpop.f32.mrf.mxu0
    %497 = vmatprep.mubr.f32.mxu0 0.0
    %498 = vmatmul.mubr.f32.gmra.mxu0 %v180
    %v499 = vpop.f32.mrf.mxu0
    %v500 = vadd.f32 0.0, %v499
    %v501 = vpop.f32.mrf.mxu0
    %502 = vmatprep.mubr.f32.mxu0 0.0
    %503 = vmatmul.mubr.f32.gmra.mxu0 %v183
    %v504 = vpop.f32.mrf.mxu0
    %v505 = vadd.f32 0.0, %v504
    %v506 = vpop.f32.mrf.mxu0
    %507 = vmatprep.mubr.f32.mxu0 0.0
    %508 = vmatmul.mubr.f32.gmra.mxu0 %v186
    %v509 = vpop.f32.mrf.mxu0
    %v510 = vadd.f32 0.0, %v509
    %v511 = vpop.f32.mrf.mxu0
    %512 = vmatprep.mubr.f32.mxu0 0.0
    %513 = vmatmul.mubr.f32.gmra.mxu0 %v189
    %v514 = vpop.f32.mrf.mxu0
    %v515 = vadd.f32 0.0, %v514
    %v516 = vpop.f32.mrf.mxu0
    %517 = vmatprep.mubr.f32.mxu0 0.0
    %518 = vmatmul.mubr.f32.gmra.mxu0 %v192
    %v519 = vpop.f32.mrf.mxu0
    %v520 = vadd.f32 0.0, %v519
    %v521 = vpop.f32.mrf.mxu0
    %522 = vmatprep.mubr.f32.mxu0 0.0
    %523 = vmatmul.mubr.f32.gmra.mxu0 %v195
    %v524 = vpop.f32.mrf.mxu0
    %v525 = vadd.f32 0.0, %v524
    %v526 = vpop.f32.mrf.mxu0
    %527 = vmatprep.mubr.f32.mxu0 0.0
    %528 = vmatmul.mubr.f32.gmra.mxu0 %v198
    %v529 = vpop.f32.mrf.mxu0
    %v530 = vadd.f32 0.0, %v529
    %v531 = vpop.f32.mrf.mxu0
    %532 = vmatprep.mubr.f32.mxu0 0.0
    %533 = vmatmul.mubr.f32.gmra.mxu0 %v201
    %v534 = vpop.f32.mrf.mxu0
    %v535 = vadd.f32 0.0, %v534
    %v536 = vpop.f32.mrf.mxu0
    %537 = vmatprep.mubr.f32.mxu0 0.0
    %538 = vmatmul.mubr.f32.gmra.mxu0 %v204
    %v539 = vpop.f32.mrf.mxu0
    %v540 = vadd.f32 0.0, %v539
    %v541 = vpop.f32.mrf.mxu0
    %542 = vmatprep.mubr.f32.mxu0 0.0
    %543 = vmatmul.mubr.f32.gmra.mxu0 %v207
    %v544 = vpop.f32.mrf.mxu0
    %v545 = vadd.f32 0.0, %v544
    %v546 = vpop.f32.mrf.mxu0
    %547 = vmatprep.mubr.f32.mxu0 0.0
    %548 = vmatmul.mubr.f32.gmra.mxu0 %v210
    %v549 = vpop.f32.mrf.mxu0
    %v550 = vadd.f32 0.0, %v549
    %v551 = vpop.f32.mrf.mxu0
    %552 = vmatprep.mubr.f32.mxu0 0.0
    %553 = vmatmul.mubr.f32.gmra.mxu0 %v213
    %v554 = vpop.f32.mrf.mxu0
    %v555 = vadd.f32 0.0, %v554
    %v556 = vpop.f32.mrf.mxu0
    %557 = vmatprep.mubr.f32.mxu0 0.0
    %558 = vmatmul.mubr.f32.gmra.mxu0 %v216
    %v559 = vpop.f32.mrf.mxu0
    %v560 = vadd.f32 0.0, %v559
    %v561 = vpop.f32.mrf.mxu0
    %562 = vmatprep.mubr.f32.mxu0 0.0
    %563 = vmatmul.mubr.f32.gmra.mxu0 %v219
    %v564 = vpop.f32.mrf.mxu0
    %v565 = vadd.f32 0.0, %v564
    %v566 = vpop.f32.mrf.mxu0
    %567 = vmatprep.mubr.f32.mxu0 0.0
    %568 = vmatmul.mubr.f32.gmra.mxu0 %v222
    %v569 = vpop.f32.mrf.mxu0
    %v570 = vadd.f32 0.0, %v569
    %v571 = vpop.f32.mrf.mxu0
    %572 = vmatprep.mubr.f32.mxu0 0.0
    %573 = vmatmul.mubr.f32.gmra.mxu0 %v225
    %v574 = vpop.f32.mrf.mxu0
    %v575 = vadd.f32 0.0, %v574
    %v576 = vpop.f32.mrf.mxu0
    %577 = vmatprep.mubr.f32.mxu0 0.0
    %578 = vmatmul.mubr.f32.gmra.mxu0 %v228
    %v579 = vpop.f32.mrf.mxu0
    %v580 = vadd.f32 0.0, %v579
    %v581 = vpop.f32.mrf.mxu0
    %582 = vmatprep.mubr.f32.mxu0 0.0
    %583 = vmatmul.mubr.f32.gmra.mxu0 %v231
    %v584 = vpop.f32.mrf.mxu0
    %v585 = vadd.f32 0.0, %v584
    %v586 = vpop.f32.mrf.mxu0
    %587 = vmatprep.mubr.f32.mxu0 0.0
    %588 = vmatmul.mubr.f32.gmra.mxu0 %v234
    %v589 = vpop.f32.mrf.mxu0
    %v590 = vadd.f32 0.0, %v589
    %v591 = vpop.f32.mrf.mxu0
    %592 = vmatprep.mubr.f32.mxu0 0.0
    %593 = vmatmul.mubr.f32.gmra.mxu0 %v237
    %v594 = vpop.f32.mrf.mxu0
    %v595 = vadd.f32 0.0, %v594
    %v596 = vpop.f32.mrf.mxu0
    %597 = vmatprep.mubr.f32.mxu0 0.0
    %598 = vmatmul.mubr.f32.gmra.mxu0 %v240
    %v599 = vpop.f32.mrf.mxu0
    %v600 = vadd.f32 0.0, %v599
    %v601 = vpop.f32.mrf.mxu0
    %602 = vmatprep.mubr.f32.mxu0 0.0
    %603 = vmatmul.mubr.f32.gmra.mxu0 %v243
    %v604 = vpop.f32.mrf.mxu0
    %v605 = vadd.f32 0.0, %v604
    %v606 = vpop.f32.mrf.mxu0
    %607 = vmatprep.mubr.f32.mxu0 0.0
    %608 = vmatmul.mubr.f32.gmra.mxu0 %v246
    %v609 = vpop.f32.mrf.mxu0
    %v610 = vadd.f32 0.0, %v609
    %v611 = vpop.f32.mrf.mxu0
    %612 = vmatprep.mubr.f32.mxu0 0.0
    %613 = vmatmul.mubr.f32.gmra.mxu0 %v249
    %v614 = vpop.f32.mrf.mxu0
    %v615 = vadd.f32 0.0, %v614
    %v616 = vpop.f32.mrf.mxu0
    %617 = vmatprep.mubr.f32.mxu0 0.0
    %618 = vmatmul.mubr.f32.gmra.mxu0 %v252
    %v619 = vpop.f32.mrf.mxu0
    %v620 = vadd.f32 0.0, %v619
    %v621 = vpop.f32.mrf.mxu0
    %622 = vmatprep.mubr.f32.mxu0 0.0
    %623 = vmatmul.mubr.f32.gmra.mxu0 %v255
    %v624 = vpop.f32.mrf.mxu0
    %v625 = vadd.f32 0.0, %v624
    %v626 = vpop.f32.mrf.mxu0
    %627 = vmatprep.mubr.f32.mxu0 0.0
    %628 = vmatmul.mubr.f32.gmra.mxu0 %v258
    %v629 = vpop.f32.mrf.mxu0
    %v630 = vadd.f32 0.0, %v629
    %v631 = vpop.f32.mrf.mxu0
    %632 = vmatprep.mubr.f32.mxu0 0.0
    %633 = vmatmul.mubr.f32.gmra.mxu0 %v261
    %v634 = vpop.f32.mrf.mxu0
    %v635 = vadd.f32 0.0, %v634
    %v636 = vpop.f32.mrf.mxu0
    %637 = vmatprep.mubr.f32.mxu0 0.0
    %638 = vmatmul.mubr.f32.gmra.mxu0 %v264
    %v639 = vpop.f32.mrf.mxu0
    %v640 = vadd.f32 0.0, %v639
    %v641 = vpop.f32.mrf.mxu0
    %642 = vmatprep.mubr.f32.mxu0 0.0
    %643 = vmatmul.mubr.f32.gmra.mxu0 %v267
    %v644 = vpop.f32.mrf.mxu0
    %v645 = vadd.f32 0.0, %v644
    %v646 = vpop.f32.mrf.mxu0
    %647 = vmatprep.mubr.f32.mxu0 0.0
    %648 = vmatmul.mubr.f32.gmra.mxu0 %v270
    %v649 = vpop.f32.mrf.mxu0
    %v650 = vadd.f32 0.0, %v649
    %v651 = vpop.f32.mrf.mxu0
    %652 = vmatprep.mubr.f32.mxu0 0.0
    %653 = vmatmul.mubr.f32.gmra.mxu0 %v273
    %v654 = vpop.f32.mrf.mxu0
    %v655 = vadd.f32 0.0, %v654
    %v656 = vpop.f32.mrf.mxu0
    %657 = vmatprep.mubr.f32.mxu0 0.0
    %658 = vmatmul.mubr.f32.gmra.mxu0 %v276
    %v659 = vpop.f32.mrf.mxu0
    %v660 = vadd.f32 0.0, %v659
    %v661 = vpop.f32.mrf.mxu0
    %662 = vmatprep.mubr.f32.mxu0 0.0
    %663 = vmatmul.mubr.f32.gmra.mxu0 %v279
    %v664 = vpop.f32.mrf.mxu0
    %v665 = vadd.f32 0.0, %v664
    %v666 = vpop.f32.mrf.mxu0
    %667 = vmatprep.mubr.f32.mxu0 0.0
    %668 = vmatmul.mubr.f32.gmra.mxu0 %v282
    %v669 = vpop.f32.mrf.mxu0
    %v670 = vadd.f32 0.0, %v669
    %v671 = vpop.f32.mrf.mxu0
    %672 = vdwg.mxu0
    %v673 = vmul.f32 %v355, 0.2
    %v674 = vmul.f32 %v360, 0.2
    %v675 = vmul.f32 %v365, 0.2
    %v676 = vmul.f32 %v370, 0.2
    %v677 = vmul.f32 %v375, 0.2
    %v678 = vmul.f32 %v380, 0.2
    %v679 = vmul.f32 %v385, 0.2
    %v680 = vmul.f32 %v390, 0.2
    %v681 = vmul.f32 %v395, 0.2
    %v682 = vmul.f32 %v400, 0.2
    %v683 = vmul.f32 %v405, 0.2
    %v684 = vmul.f32 %v410, 0.2
    %v685 = vmul.f32 %v415, 0.2
    %v686 = vmul.f32 %v420, 0.2
    %v687 = vmul.f32 %v425, 0.2
    %v688 = vmul.f32 %v430, 0.2
    %v689 = vmul.f32 %v435, 0.2
    %v690 = vmul.f32 %v440, 0.2
    %v691 = vmul.f32 %v445, 0.2
    %v692 = vmul.f32 %v450, 0.2
    %v693 = vmul.f32 %v455, 0.2
    %v694 = vmul.f32 %v460, 0.2
    %v695 = vmul.f32 %v465, 0.2
    %v696 = vmul.f32 %v470, 0.2
    %v697 = vmul.f32 %v475, 0.2
    %v698 = vmul.f32 %v480, 0.2
    %v699 = vmul.f32 %v485, 0.2
    %v700 = vmul.f32 %v490, 0.2
    %v701 = vmul.f32 %v495, 0.2
    %v702 = vmul.f32 %v500, 0.2
    %v703 = vmul.f32 %v505, 0.2
    %v704 = vmul.f32 %v510, 0.2
    %v705 = vmul.f32 %v515, 0.2
    %v706 = vmul.f32 %v520, 0.2
    %v707 = vmul.f32 %v525, 0.2
    %v708 = vmul.f32 %v530, 0.2
    %v709 = vmul.f32 %v535, 0.2
    %v710 = vmul.f32 %v540, 0.2
    %v711 = vmul.f32 %v545, 0.2
    %v712 = vmul.f32 %v550, 0.2
    %v713 = vmul.f32 %v555, 0.2
    %v714 = vmul.f32 %v560, 0.2
    %v715 = vmul.f32 %v565, 0.2
    %v716 = vmul.f32 %v570, 0.2
    %v717 = vmul.f32 %v575, 0.2
    %v718 = vmul.f32 %v580, 0.2
    %v719 = vmul.f32 %v585, 0.2
    %v720 = vmul.f32 %v590, 0.2
    %v721 = vmul.f32 %v595, 0.2
    %v722 = vmul.f32 %v600, 0.2
    %v723 = vmul.f32 %v605, 0.2
    %v724 = vmul.f32 %v610, 0.2
    %v725 = vmul.f32 %v615, 0.2
    %v726 = vmul.f32 %v620, 0.2
    %v727 = vmul.f32 %v625, 0.2
    %v728 = vmul.f32 %v630, 0.2
    %v729 = vmul.f32 %v635, 0.2
    %v730 = vmul.f32 %v640, 0.2
    %v731 = vmul.f32 %v645, 0.2
    %v732 = vmul.f32 %v650, 0.2
    %v733 = vmul.f32 %v655, 0.2
    %v734 = vmul.f32 %v660, 0.2
    %v735 = vmul.f32 %v665, 0.2
    %v736 = vmul.f32 %v670, 0.2
    %v737 = vmax.f32 %v355, %v673
    %v738 = vmax.f32 %v360, %v674
    %v739 = vmax.f32 %v365, %v675
    %v740 = vmax.f32 %v370, %v676
    %v741 = vmax.f32 %v375, %v677
    %v742 = vmax.f32 %v380, %v678
    %v743 = vmax.f32 %v385, %v679
    %v744 = vmax.f32 %v390, %v680
    %v745 = vmax.f32 %v395, %v681
    %v746 = vmax.f32 %v400, %v682
    %v747 = vmax.f32 %v405, %v683
    %v748 = vmax.f32 %v410, %v684
    %v749 = vmax.f32 %v415, %v685
    %v750 = vmax.f32 %v420, %v686
    %v751 = vmax.f32 %v425, %v687
    %v752 = vmax.f32 %v430, %v688
    %v753 = vmax.f32 %v435, %v689
    %v754 = vmax.f32 %v440, %v690
    %v755 = vmax.f32 %v445, %v691
    %v756 = vmax.f32 %v450, %v692
    %v757 = vmax.f32 %v455, %v693
    %v758 = vmax.f32 %v460, %v694
    %v759 = vmax.f32 %v465, %v695
    %v760 = vmax.f32 %v470, %v696
    %v761 = vmax.f32 %v475, %v697
    %v762 = vmax.f32 %v480, %v698
    %v763 = vmax.f32 %v485, %v699
    %v764 = vmax.f32 %v490, %v700
    %v765 = vmax.f32 %v495, %v701
    %v766 = vmax.f32 %v500, %v702
    %v767 = vmax.f32 %v505, %v703
    %v768 = vmax.f32 %v510, %v704
    %v769 = vmax.f32 %v515, %v705
    %v770 = vmax.f32 %v520, %v706
    %v771 = vmax.f32 %v525, %v707
    %v772 = vmax.f32 %v530, %v708
    %v773 = vmax.f32 %v535, %v709
    %v774 = vmax.f32 %v540, %v710
    %v775 = vmax.f32 %v545, %v711
    %v776 = vmax.f32 %v550, %v712
    %v777 = vmax.f32 %v555, %v713
    %v778 = vmax.f32 %v560, %v714
    %v779 = vmax.f32 %v565, %v715
    %v780 = vmax.f32 %v570, %v716
    %v781 = vmax.f32 %v575, %v717
    %v782 = vmax.f32 %v580, %v718
    %v783 = vmax.f32 %v585, %v719
    %v784 = vmax.f32 %v590, %v720
    %v785 = vmax.f32 %v595, %v721
    %v786 = vmax.f32 %v600, %v722
    %v787 = vmax.f32 %v605, %v723
    %v788 = vmax.f32 %v610, %v724
    %v789 = vmax.f32 %v615, %v725
    %v790 = vmax.f32 %v620, %v726
    %v791 = vmax.f32 %v625, %v727
    %v792 = vmax.f32 %v630, %v728
    %v793 = vmax.f32 %v635, %v729
    %v794 = vmax.f32 %v640, %v730
    %v795 = vmax.f32 %v645, %v731
    %v796 = vmax.f32 %v650, %v732
    %v797 = vmax.f32 %v655, %v733
    %v798 = vmax.f32 %v660, %v734
    %v799 = vmax.f32 %v665, %v735
    %v800 = vmax.f32 %v670, %v736
    %v801 = vld [vmem:[%s2] sm:$0xff]
    %v802 = vld [vmem:[%s2 + $0x8] sm:$0xff]
    %v803 = vld [vmem:[%s2 + $0x10] sm:$0xff]
    %v804 = vld [vmem:[%s2 + $0x18] sm:$0xff]
    %v805 = vld [vmem:[%s2 + $0x20] sm:$0xff]
    %v806 = vld [vmem:[%s2 + $0x28] sm:$0xff]
    %v807 = vld [vmem:[%s2 + $0x30] sm:$0xff]
    %v808 = vld [vmem:[%s2 + $0x38] sm:$0xff]
    %v809 = vld [vmem:[%s2 + $0x40] sm:$0xff]
    %v810 = vld [vmem:[%s2 + $0x48] sm:$0xff]
    %v811 = vld [vmem:[%s2 + $0x50] sm:$0xff]
    %v812 = vld [vmem:[%s2 + $0x58] sm:$0xff]
    %v813 = vld [vmem:[%s2 + $0x60] sm:$0xff]
    %v814 = vld [vmem:[%s2 + $0x68] sm:$0xff]
    %v815 = vld [vmem:[%s2 + $0x70] sm:$0xff]
    %v816 = vld [vmem:[%s2 + $0x78] sm:$0xff]
    %v817 = vld [vmem:[%s2 + $0x80] sm:$0xff]
    %v818 = vld [vmem:[%s2 + $0x88] sm:$0xff]
    %v819 = vld [vmem:[%s2 + $0x90] sm:$0xff]
    %v820 = vld [vmem:[%s2 + $0x98] sm:$0xff]
    %v821 = vld [vmem:[%s2 + $0xa0] sm:$0xff]
    %v822 = vld [vmem:[%s2 + $0xa8] sm:$0xff]
    %v823 = vld [vmem:[%s2 + $0xb0] sm:$0xff]
    %v824 = vld [vmem:[%s2 + $0xb8] sm:$0xff]
    %v825 = vld [vmem:[%s2 + $0xc0] sm:$0xff]
    %v826 = vld [vmem:[%s2 + $0xc8] sm:$0xff]
    %v827 = vld [vmem:[%s2 + $0xd0] sm:$0xff]
    %v828 = vld [vmem:[%s2 + $0xd8] sm:$0xff]
    %v829 = vld [vmem:[%s2 + $0xe0] sm:$0xff]
    %v830 = vld [vmem:[%s2 + $0xe8] sm:$0xff]
    %v831 = vld [vmem:[%s2 + $0xf0] sm:$0xff]
    %v832 = vld [vmem:[%s2 + $0xf8] sm:$0xff]
    %v833 = vld [vmem:[%s2 + $0x100] sm:$0xff]
    %v834 = vld [vmem:[%s2 + $0x108] sm:$0xff]
    %v835 = vld [vmem:[%s2 + $0x110] sm:$0xff]
    %v836 = vld [vmem:[%s2 + $0x118] sm:$0xff]
    %v837 = vld [vmem:[%s2 + $0x120] sm:$0xff]
    %v838 = vld [vmem:[%s2 + $0x128] sm:$0xff]
    %v839 = vld [vmem:[%s2 + $0x130] sm:$0xff]
    %v840 = vld [vmem:[%s2 + $0x138] sm:$0xff]
    %v841 = vld [vmem:[%s2 + $0x140] sm:$0xff]
    %v842 = vld [vmem:[%s2 + $0x148] sm:$0xff]
    %v843 = vld [vmem:[%s2 + $0x150] sm:$0xff]
    %v844 = vld [vmem:[%s2 + $0x158] sm:$0xff]
    %v845 = vld [vmem:[%s2 + $0x160] sm:$0xff]
    %v846 = vld [vmem:[%s2 + $0x168] sm:$0xff]
    %v847 = vld [vmem:[%s2 + $0x170] sm:$0xff]
    %v848 = vld [vmem:[%s2 + $0x178] sm:$0xff]
    %v849 = vld [vmem:[%s2 + $0x180] sm:$0xff]
    %v850 = vld [vmem:[%s2 + $0x188] sm:$0xff]
    %v851 = vld [vmem:[%s2 + $0x190] sm:$0xff]
    %v852 = vld [vmem:[%s2 + $0x198] sm:$0xff]
    %v853 = vld [vmem:[%s2 + $0x1a0] sm:$0xff]
    %v854 = vld [vmem:[%s2 + $0x1a8] sm:$0xff]
    %v855 = vld [vmem:[%s2 + $0x1b0] sm:$0xff]
    %v856 = vld [vmem:[%s2 + $0x1b8] sm:$0xff]
    %v857 = vld [vmem:[%s2 + $0x1c0] sm:$0xff]
    %v858 = vld [vmem:[%s2 + $0x1c8] sm:$0xff]
    %v859 = vld [vmem:[%s2 + $0x1d0] sm:$0xff]
    %v860 = vld [vmem:[%s2 + $0x1d8] sm:$0xff]
    %v861 = vld [vmem:[%s2 + $0x1e0] sm:$0xff]
    %v862 = vld [vmem:[%s2 + $0x1e8] sm:$0xff]
    %v863 = vld [vmem:[%s2 + $0x1f0] sm:$0xff]
    %v864 = vld [vmem:[%s2 + $0x1f8] sm:$0xff]
    %v865 = vld [vmem:[%s2 + $0x200] sm:$0xff]
    %v866 = vld [vmem:[%s2 + $0x208] sm:$0xff]
    %v867 = vld [vmem:[%s2 + $0x210] sm:$0xff]
    %v868 = vld [vmem:[%s2 + $0x218] sm:$0xff]
    %v869 = vld [vmem:[%s2 + $0x220] sm:$0xff]
    %v870 = vld [vmem:[%s2 + $0x228] sm:$0xff]
    %v871 = vld [vmem:[%s2 + $0x230] sm:$0xff]
    %v872 = vld [vmem:[%s2 + $0x238] sm:$0xff]
    %v873 = vld [vmem:[%s2 + $0x240] sm:$0xff]
    %v874 = vld [vmem:[%s2 + $0x248] sm:$0xff]
    %v875 = vld [vmem:[%s2 + $0x250] sm:$0xff]
    %v876 = vld [vmem:[%s2 + $0x258] sm:$0xff]
    %v877 = vld [vmem:[%s2 + $0x260] sm:$0xff]
    %v878 = vld [vmem:[%s2 + $0x268] sm:$0xff]
    %v879 = vld [vmem:[%s2 + $0x270] sm:$0xff]
    %v880 = vld [vmem:[%s2 + $0x278] sm:$0xff]
    %v881 = vld [vmem:[%s2 + $0x280] sm:$0xff]
    %v882 = vld [vmem:[%s2 + $0x288] sm:$0xff]
    %v883 = vld [vmem:[%s2 + $0x290] sm:$0xff]
    %v884 = vld [vmem:[%s2 + $0x298] sm:$0xff]
    %v885 = vld [vmem:[%s2 + $0x2a0] sm:$0xff]
    %v886 = vld [vmem:[%s2 + $0x2a8] sm:$0xff]
    %v887 = vld [vmem:[%s2 + $0x2b0] sm:$0xff]
    %v888 = vld [vmem:[%s2 + $0x2b8] sm:$0xff]
    %v889 = vld [vmem:[%s2 + $0x2c0] sm:$0xff]
    %v890 = vld [vmem:[%s2 + $0x2c8] sm:$0xff]
    %v891 = vld [vmem:[%s2 + $0x2d0] sm:$0xff]
    %v892 = vld [vmem:[%s2 + $0x2d8] sm:$0xff]
    %v893 = vld [vmem:[%s2 + $0x2e0] sm:$0xff]
    %v894 = vld [vmem:[%s2 + $0x2e8] sm:$0xff]
    %v895 = vld [vmem:[%s2 + $0x2f0] sm:$0xff]
    %v896 = vld [vmem:[%s2 + $0x2f8] sm:$0xff]
    %v897 = vld [vmem:[%s2 + $0x300] sm:$0xff]
    %v898 = vld [vmem:[%s2 + $0x308] sm:$0xff]
    %v899 = vld [vmem:[%s2 + $0x310] sm:$0xff]
    %v900 = vld [vmem:[%s2 + $0x318] sm:$0xff]
    %v901 = vld [vmem:[%s2 + $0x320] sm:$0xff]
    %v902 = vld [vmem:[%s2 + $0x328] sm:$0xff]
    %v903 = vld [vmem:[%s2 + $0x330] sm:$0xff]
    %v904 = vld [vmem:[%s2 + $0x338] sm:$0xff]
    %v905 = vld [vmem:[%s2 + $0x340] sm:$0xff]
    %v906 = vld [vmem:[%s2 + $0x348] sm:$0xff]
    %v907 = vld [vmem:[%s2 + $0x350] sm:$0xff]
    %v908 = vld [vmem:[%s2 + $0x358] sm:$0xff]
    %v909 = vld [vmem:[%s2 + $0x360] sm:$0xff]
    %v910 = vld [vmem:[%s2 + $0x368] sm:$0xff]
    %v911 = vld [vmem:[%s2 + $0x370] sm:$0xff]
    %v912 = vld [vmem:[%s2 + $0x378] sm:$0xff]
    %v913 = vld [vmem:[%s2 + $0x380] sm:$0xff]
    %v914 = vld [vmem:[%s2 + $0x388] sm:$0xff]
    %v915 = vld [vmem:[%s2 + $0x390] sm:$0xff]
    %v916 = vld [vmem:[%s2 + $0x398] sm:$0xff]
    %v917 = vld [vmem:[%s2 + $0x3a0] sm:$0xff]
    %v918 = vld [vmem:[%s2 + $0x3a8] sm:$0xff]
    %v919 = vld [vmem:[%s2 + $0x3b0] sm:$0xff]
    %v920 = vld [vmem:[%s2 + $0x3b8] sm:$0xff]
    %v921 = vld [vmem:[%s2 + $0x3c0] sm:$0xff]
    %v922 = vld [vmem:[%s2 + $0x3c8] sm:$0xff]
    %v923 = vld [vmem:[%s2 + $0x3d0] sm:$0xff]
    %v924 = vld [vmem:[%s2 + $0x3d8] sm:$0xff]
    %v925 = vld [vmem:[%s2 + $0x3e0] sm:$0xff]
    %v926 = vld [vmem:[%s2 + $0x3e8] sm:$0xff]
    %v927 = vld [vmem:[%s2 + $0x3f0] sm:$0xff]
    %v928 = vld [vmem:[%s2 + $0x3f8] sm:$0xff]
    %v929 = vld [vmem:[%s3] sm:$0xff]
    %v930 = vld [vmem:[%s3 + $0x8] sm:$0xff]
    %v931 = vld [vmem:[%s3 + $0x10] sm:$0xff]
    %v932 = vld [vmem:[%s3 + $0x18] sm:$0xff]
    %v933 = vld [vmem:[%s3 + $0x20] sm:$0xff]
    %v934 = vld [vmem:[%s3 + $0x28] sm:$0xff]
    %v935 = vld [vmem:[%s3 + $0x30] sm:$0xff]
    %v936 = vld [vmem:[%s3 + $0x38] sm:$0xff]
    %v937 = vld [vmem:[%s3 + $0x40] sm:$0xff]
    %v938 = vld [vmem:[%s3 + $0x48] sm:$0xff]
    %v939 = vld [vmem:[%s3 + $0x50] sm:$0xff]
    %v940 = vld [vmem:[%s3 + $0x58] sm:$0xff]
    %v941 = vld [vmem:[%s3 + $0x60] sm:$0xff]
    %v942 = vld [vmem:[%s3 + $0x68] sm:$0xff]
    %v943 = vld [vmem:[%s3 + $0x70] sm:$0xff]
    %v944 = vld [vmem:[%s3 + $0x78] sm:$0xff]
    %v945 = vld [vmem:[%s3 + $0x80] sm:$0xff]
    %v946 = vld [vmem:[%s3 + $0x88] sm:$0xff]
    %v947 = vld [vmem:[%s3 + $0x90] sm:$0xff]
    %v948 = vld [vmem:[%s3 + $0x98] sm:$0xff]
    %v949 = vld [vmem:[%s3 + $0xa0] sm:$0xff]
    %v950 = vld [vmem:[%s3 + $0xa8] sm:$0xff]
    %v951 = vld [vmem:[%s3 + $0xb0] sm:$0xff]
    %v952 = vld [vmem:[%s3 + $0xb8] sm:$0xff]
    %v953 = vld [vmem:[%s3 + $0xc0] sm:$0xff]
    %v954 = vld [vmem:[%s3 + $0xc8] sm:$0xff]
    %v955 = vld [vmem:[%s3 + $0xd0] sm:$0xff]
    %v956 = vld [vmem:[%s3 + $0xd8] sm:$0xff]
    %v957 = vld [vmem:[%s3 + $0xe0] sm:$0xff]
    %v958 = vld [vmem:[%s3 + $0xe8] sm:$0xff]
    %v959 = vld [vmem:[%s3 + $0xf0] sm:$0xff]
    %v960 = vld [vmem:[%s3 + $0xf8] sm:$0xff]
    %962 = vset.pattern.permute.xlu0 0
    %963 = vperm.xlu0 %962, %v929
    %v964 = vpop.permute.xlu0 %963
    %967 = vset.pattern.permute.xlu0 0
    %968 = vperm.xlu0 %967, %v930
    %v969 = vpop.permute.xlu0 %968
    %972 = vset.pattern.permute.xlu0 0
    %973 = vperm.xlu0 %972, %v931
    %v974 = vpop.permute.xlu0 %973
    %977 = vset.pattern.permute.xlu0 0
    %978 = vperm.xlu0 %977, %v932
    %v979 = vpop.permute.xlu0 %978
    %982 = vset.pattern.permute.xlu0 0
    %983 = vperm.xlu0 %982, %v933
    %v984 = vpop.permute.xlu0 %983
    %987 = vset.pattern.permute.xlu0 0
    %988 = vperm.xlu0 %987, %v934
    %v989 = vpop.permute.xlu0 %988
    %992 = vset.pattern.permute.xlu0 0
    %993 = vperm.xlu0 %992, %v935
    %v994 = vpop.permute.xlu0 %993
    %997 = vset.pattern.permute.xlu0 0
    %998 = vperm.xlu0 %997, %v936
    %v999 = vpop.permute.xlu0 %998
    %1002 = vset.pattern.permute.xlu0 0
    %1003 = vperm.xlu0 %1002, %v937
    %v1004 = vpop.permute.xlu0 %1003
    %1007 = vset.pattern.permute.xlu0 0
    %1008 = vperm.xlu0 %1007, %v938
    %v1009 = vpop.permute.xlu0 %1008
    %1012 = vset.pattern.permute.xlu0 0
    %1013 = vperm.xlu0 %1012, %v939
    %v1014 = vpop.permute.xlu0 %1013
    %1017 = vset.pattern.permute.xlu0 0
    %1018 = vperm.xlu0 %1017, %v940
    %v1019 = vpop.permute.xlu0 %1018
    %1022 = vset.pattern.permute.xlu0 0
    %1023 = vperm.xlu0 %1022, %v941
    %v1024 = vpop.permute.xlu0 %1023
    %1027 = vset.pattern.permute.xlu0 0
    %1028 = vperm.xlu0 %1027, %v942
    %v1029 = vpop.permute.xlu0 %1028
    %1032 = vset.pattern.permute.xlu0 0
    %1033 = vperm.xlu0 %1032, %v943
    %v1034 = vpop.permute.xlu0 %1033
    %1037 = vset.pattern.permute.xlu0 0
    %1038 = vperm.xlu0 %1037, %v944
    %v1039 = vpop.permute.xlu0 %1038
    %1042 = vset.pattern.permute.xlu0 0
    %1043 = vperm.xlu0 %1042, %v945
    %v1044 = vpop.permute.xlu0 %1043
    %1047 = vset.pattern.permute.xlu0 0
    %1048 = vperm.xlu0 %1047, %v946
    %v1049 = vpop.permute.xlu0 %1048
    %1052 = vset.pattern.permute.xlu0 0
    %1053 = vperm.xlu0 %1052, %v947
    %v1054 = vpop.permute.xlu0 %1053
    %1057 = vset.pattern.permute.xlu0 0
    %1058 = vperm.xlu0 %1057, %v948
    %v1059 = vpop.permute.xlu0 %1058
    %1062 = vset.pattern.permute.xlu0 0
    %1063 = vperm.xlu0 %1062, %v949
    %v1064 = vpop.permute.xlu0 %1063
    %1067 = vset.pattern.permute.xlu0 0
    %1068 = vperm.xlu0 %1067, %v950
    %v1069 = vpop.permute.xlu0 %1068
    %1072 = vset.pattern.permute.xlu0 0
    %1073 = vperm.xlu0 %1072, %v951
    %v1074 = vpop.permute.xlu0 %1073
    %1077 = vset.pattern.permute.xlu0 0
    %1078 = vperm.xlu0 %1077, %v952
    %v1079 = vpop.permute.xlu0 %1078
    %1082 = vset.pattern.permute.xlu0 0
    %1083 = vperm.xlu0 %1082, %v953
    %v1084 = vpop.permute.xlu0 %1083
    %1087 = vset.pattern.permute.xlu0 0
    %1088 = vperm.xlu0 %1087, %v954
    %v1089 = vpop.permute.xlu0 %1088
    %1092 = vset.pattern.permute.xlu0 0
    %1093 = vperm.xlu0 %1092, %v955
    %v1094 = vpop.permute.xlu0 %1093
    %1097 = vset.pattern.permute.xlu0 0
    %1098 = vperm.xlu0 %1097, %v956
    %v1099 = vpop.permute.xlu0 %1098
    %1102 = vset.pattern.permute.xlu0 0
    %1103 = vperm.xlu0 %1102, %v957
    %v1104 = vpop.permute.xlu0 %1103
    %1107 = vset.pattern.permute.xlu0 0
    %1108 = vperm.xlu0 %1107, %v958
    %v1109 = vpop.permute.xlu0 %1108
    %1112 = vset.pattern.permute.xlu0 0
    %1113 = vperm.xlu0 %1112, %v959
    %v1114 = vpop.permute.xlu0 %1113
    %1117 = vset.pattern.permute.xlu0 0
    %1118 = vperm.xlu0 %1117, %v960
    %v1119 = vpop.permute.xlu0 %1118
    %1121 = vmatprep.subr.mxu0 0.0
    %1122 = vmatpush1.msra.mxu0 %v752
    %1123 = vmatprep.subr.mxu0 0.0
    %1124 = vmatpush1.msra.mxu0 %v751
    %1125 = vmatprep.subr.mxu0 0.0
    %1126 = vmatpush1.msra.mxu0 %v750
    %1127 = vmatprep.subr.mxu0 0.0
    %1128 = vmatpush1.msra.mxu0 %v749
    %1129 = vmatprep.subr.mxu0 0.0
    %1130 = vmatpush1.msra.mxu0 %v748
    %1131 = vmatprep.subr.mxu0 0.0
    %1132 = vmatpush1.msra.mxu0 %v747
    %1133 = vmatprep.subr.mxu0 0.0
    %1134 = vmatpush1.msra.mxu0 %v746
    %1135 = vmatprep.subr.mxu0 0.0
    %1136 = vmatpush1.msra.mxu0 %v745
    %1137 = vmatprep.subr.mxu0 0.0
    %1138 = vmatpush1.msra.mxu0 %v744
    %1139 = vmatprep.subr.mxu0 0.0
    %1140 = vmatpush1.msra.mxu0 %v743
    %1141 = vmatprep.subr.mxu0 0.0
    %1142 = vmatpush1.msra.mxu0 %v742
    %1143 = vmatprep.subr.mxu0 0.0
    %1144 = vmatpush1.msra.mxu0 %v741
    %1145 = vmatprep.subr.mxu0 0.0
    %1146 = vmatpush1.msra.mxu0 %v740
    %1147 = vmatprep.subr.mxu0 0.0
    %1148 = vmatpush1.msra.mxu0 %v739
    %1149 = vmatprep.subr.mxu0 0.0
    %1150 = vmatpush1.msra.mxu0 %v738
    %1151 = vmatprep.subr.mxu0 0.0
    %1152 = vmatpush1.msra.mxu0 %v737
    %1153 = vmatprep.subr.mxu0 0.0
    %1154 = vmatpush2.msra.mxu0 %v768
    %1155 = vmatprep.subr.mxu0 0.0
    %1156 = vmatpush2.msra.mxu0 %v767
    %1157 = vmatprep.subr.mxu0 0.0
    %1158 = vmatpush2.msra.mxu0 %v766
    %1159 = vmatprep.subr.mxu0 0.0
    %1160 = vmatpush2.msra.mxu0 %v765
    %1161 = vmatprep.subr.mxu0 0.0
    %1162 = vmatpush2.msra.mxu0 %v764
    %1163 = vmatprep.subr.mxu0 0.0
    %1164 = vmatpush2.msra.mxu0 %v763
    %1165 = vmatprep.subr.mxu0 0.0
    %1166 = vmatpush2.msra.mxu0 %v762
    %1167 = vmatprep.subr.mxu0 0.0
    %1168 = vmatpush2.msra.mxu0 %v761
    %1169 = vmatprep.subr.mxu0 0.0
    %1170 = vmatpush2.msra.mxu0 %v760
    %1171 = vmatprep.subr.mxu0 0.0
    %1172 = vmatpush2.msra.mxu0 %v759
    %1173 = vmatprep.subr.mxu0 0.0
    %1174 = vmatpush2.msra.mxu0 %v758
    %1175 = vmatprep.subr.mxu0 0.0
    %1176 = vmatpush2.msra.mxu0 %v757
    %1177 = vmatprep.subr.mxu0 0.0
    %1178 = vmatpush2.msra.mxu0 %v756
    %1179 = vmatprep.subr.mxu0 0.0
    %1180 = vmatpush2.msra.mxu0 %v755
    %1181 = vmatprep.subr.mxu0 0.0
    %1182 = vmatpush2.msra.mxu0 %v754
    %1183 = vmatprep.subr.mxu0 0.0
    %1184 = vmatpush2.msra.mxu0 %v753
    %1185 = vmatprep.mubr.f32.mxu0 %v802
    %1186 = vmatmul.mubr.f32.gmra.mxu0 %v801
    %v1187 = vpop.f32.mrf.mxu0
    %v1188 = vadd.f32 %v964, %v1187
    %v1189 = vpop.f32.mrf.mxu0
    %1190 = vmatprep.mubr.f32.mxu0 %v806
    %1191 = vmatmul.mubr.f32.gmra.mxu0 %v805
    %v1192 = vpop.f32.mrf.mxu0
    %v1193 = vadd.f32 %v969, %v1192
    %v1194 = vpop.f32.mrf.mxu0
    %1195 = vmatprep.mubr.f32.mxu0 %v810
    %1196 = vmatmul.mubr.f32.gmra.mxu0 %v809
    %v1197 = vpop.f32.mrf.mxu0
    %v1198 = vadd.f32 %v974, %v1197
    %v1199 = vpop.f32.mrf.mxu0
    %1200 = vmatprep.mubr.f32.mxu0 %v814
    %1201 = vmatmul.mubr.f32.gmra.mxu0 %v813
    %v1202 = vpop.f32.mrf.mxu0
    %v1203 = vadd.f32 %v979, %v1202
    %v1204 = vpop.f32.mrf.mxu0
    %1205 = vmatprep.mubr.f32.mxu0 %v818
    %1206 = vmatmul.mubr.f32.gmra.mxu0 %v817
    %v1207 = vpop.f32.mrf.mxu0
    %v1208 = vadd.f32 %v984, %v1207
    %v1209 = vpop.f32.mrf.mxu0
    %1210 = vmatprep.mubr.f32.mxu0 %v822
    %1211 = vmatmul.mubr.f32.gmra.mxu0 %v821
    %v1212 = vpop.f32.mrf.mxu0
    %v1213 = vadd.f32 %v989, %v1212
    %v1214 = vpop.f32.mrf.mxu0
    %1215 = vmatprep.mubr.f32.mxu0 %v826
    %1216 = vmatmul.mubr.f32.gmra.mxu0 %v825
    %v1217 = vpop.f32.mrf.mxu0
    %v1218 = vadd.f32 %v994, %v1217
    %v1219 = vpop.f32.mrf.mxu0
    %1220 = vmatprep.mubr.f32.mxu0 %v830
    %1221 = vmatmul.mubr.f32.gmra.mxu0 %v829
    %v1222 = vpop.f32.mrf.mxu0
    %v1223 = vadd.f32 %v999, %v1222
    %v1224 = vpop.f32.mrf.mxu0
    %1225 = vmatprep.mubr.f32.mxu0 %v834
    %1226 = vmatmul.mubr.f32.gmra.mxu0 %v833
    %v1227 = vpop.f32.mrf.mxu0
    %v1228 = vadd.f32 %v1004, %v1227
    %v1229 = vpop.f32.mrf.mxu0
    %1230 = vmatprep.mubr.f32.mxu0 %v838
    %1231 = vmatmul.mubr.f32.gmra.mxu0 %v837
    %v1232 = vpop.f32.mrf.mxu0
    %v1233 = vadd.f32 %v1009, %v1232
    %v1234 = vpop.f32.mrf.mxu0
    %1235 = vmatprep.mubr.f32.mxu0 %v842
    %1236 = vmatmul.mubr.f32.gmra.mxu0 %v841
    %v1237 = vpop.f32.mrf.mxu0
    %v1238 = vadd.f32 %v1014, %v1237
    %v1239 = vpop.f32.mrf.mxu0
    %1240 = vmatprep.mubr.f32.mxu0 %v846
    %1241 = vmatmul.mubr.f32.gmra.mxu0 %v845
    %v1242 = vpop.f32.mrf.mxu0
    %v1243 = vadd.f32 %v1019, %v1242
    %v1244 = vpop.f32.mrf.mxu0
    %1245 = vmatprep.mubr.f32.mxu0 %v850
    %1246 = vmatmul.mubr.f32.gmra.mxu0 %v849
    %v1247 = vpop.f32.mrf.mxu0
    %v1248 = vadd.f32 %v1024, %v1247
    %v1249 = vpop.f32.mrf.mxu0
    %1250 = vmatprep.mubr.f32.mxu0 %v854
    %1251 = vmatmul.mubr.f32.gmra.mxu0 %v853
    %v1252 = vpop.f32.mrf.mxu0
    %v1253 = vadd.f32 %v1029, %v1252
    %v1254 = vpop.f32.mrf.mxu0
    %1255 = vmatprep.mubr.f32.mxu0 %v858
    %1256 = vmatmul.mubr.f32.gmra.mxu0 %v857
    %v1257 = vpop.f32.mrf.mxu0
    %v1258 = vadd.f32 %v1034, %v1257
    %v1259 = vpop.f32.mrf.mxu0
    %1260 = vmatprep.mubr.f32.mxu0 %v862
    %1261 = vmatmul.mubr.f32.gmra.mxu0 %v861
    %v1262 = vpop.f32.mrf.mxu0
    %v1263 = vadd.f32 %v1039, %v1262
    %v1264 = vpop.f32.mrf.mxu0
    %1265 = vmatprep.mubr.f32.mxu0 %v866
    %1266 = vmatmul.mubr.f32.gmra.mxu0 %v865
    %v1267 = vpop.f32.mrf.mxu0
    %v1268 = vadd.f32 %v1044, %v1267
    %v1269 = vpop.f32.mrf.mxu0
    %1270 = vmatprep.mubr.f32.mxu0 %v870
    %1271 = vmatmul.mubr.f32.gmra.mxu0 %v869
    %v1272 = vpop.f32.mrf.mxu0
    %v1273 = vadd.f32 %v1049, %v1272
    %v1274 = vpop.f32.mrf.mxu0
    %1275 = vmatprep.mubr.f32.mxu0 %v874
    %1276 = vmatmul.mubr.f32.gmra.mxu0 %v873
    %v1277 = vpop.f32.mrf.mxu0
    %v1278 = vadd.f32 %v1054, %v1277
    %v1279 = vpop.f32.mrf.mxu0
    %1280 = vmatprep.mubr.f32.mxu0 %v878
    %1281 = vmatmul.mubr.f32.gmra.mxu0 %v877
    %v1282 = vpop.f32.mrf.mxu0
    %v1283 = vadd.f32 %v1059, %v1282
    %v1284 = vpop.f32.mrf.mxu0
    %1285 = vmatprep.mubr.f32.mxu0 %v882
    %1286 = vmatmul.mubr.f32.gmra.mxu0 %v881
    %v1287 = vpop.f32.mrf.mxu0
    %v1288 = vadd.f32 %v1064, %v1287
    %v1289 = vpop.f32.mrf.mxu0
    %1290 = vmatprep.mubr.f32.mxu0 %v886
    %1291 = vmatmul.mubr.f32.gmra.mxu0 %v885
    %v1292 = vpop.f32.mrf.mxu0
    %v1293 = vadd.f32 %v1069, %v1292
    %v1294 = vpop.f32.mrf.mxu0
    %1295 = vmatprep.mubr.f32.mxu0 %v890
    %1296 = vmatmul.mubr.f32.gmra.mxu0 %v889
    %v1297 = vpop.f32.mrf.mxu0
    %v1298 = vadd.f32 %v1074, %v1297
    %v1299 = vpop.f32.mrf.mxu0
    %1300 = vmatprep.mubr.f32.mxu0 %v894
    %1301 = vmatmul.mubr.f32.gmra.mxu0 %v893
    %v1302 = vpop.f32.mrf.mxu0
    %v1303 = vadd.f32 %v1079, %v1302
    %v1304 = vpop.f32.mrf.mxu0
    %1305 = vmatprep.mubr.f32.mxu0 %v898
    %1306 = vmatmul.mubr.f32.gmra.mxu0 %v897
    %v1307 = vpop.f32.mrf.mxu0
    %v1308 = vadd.f32 %v1084, %v1307
    %v1309 = vpop.f32.mrf.mxu0
    %1310 = vmatprep.mubr.f32.mxu0 %v902
    %1311 = vmatmul.mubr.f32.gmra.mxu0 %v901
    %v1312 = vpop.f32.mrf.mxu0
    %v1313 = vadd.f32 %v1089, %v1312
    %v1314 = vpop.f32.mrf.mxu0
    %1315 = vmatprep.mubr.f32.mxu0 %v906
    %1316 = vmatmul.mubr.f32.gmra.mxu0 %v905
    %v1317 = vpop.f32.mrf.mxu0
    %v1318 = vadd.f32 %v1094, %v1317
    %v1319 = vpop.f32.mrf.mxu0
    %1320 = vmatprep.mubr.f32.mxu0 %v910
    %1321 = vmatmul.mubr.f32.gmra.mxu0 %v909
    %v1322 = vpop.f32.mrf.mxu0
    %v1323 = vadd.f32 %v1099, %v1322
    %v1324 = vpop.f32.mrf.mxu0
    %1325 = vmatprep.mubr.f32.mxu0 %v914
    %1326 = vmatmul.mubr.f32.gmra.mxu0 %v913
    %v1327 = vpop.f32.mrf.mxu0
    %v1328 = vadd.f32 %v1104, %v1327
    %v1329 = vpop.f32.mrf.mxu0
    %1330 = vmatprep.mubr.f32.mxu0 %v918
    %1331 = vmatmul.mubr.f32.gmra.mxu0 %v917
    %v1332 = vpop.f32.mrf.mxu0
    %v1333 = vadd.f32 %v1109, %v1332
    %v1334 = vpop.f32.mrf.mxu0
    %1335 = vmatprep.mubr.f32.mxu0 %v922
    %1336 = vmatmul.mubr.f32.gmra.mxu0 %v921
    %v1337 = vpop.f32.mrf.mxu0
    %v1338 = vadd.f32 %v1114, %v1337
    %v1339 = vpop.f32.mrf.mxu0
    %1340 = vmatprep.mubr.f32.mxu0 %v926
    %1341 = vmatmul.mubr.f32.gmra.mxu0 %v925
    %v1342 = vpop.f32.mrf.mxu0
    %v1343 = vadd.f32 %v1119, %v1342
    %v1344 = vpop.f32.mrf.mxu0
    %1345 = vdwg.mxu0
    %1346 = vmatprep.subr.mxu0 0.0
    %1347 = vmatpush1.msra.mxu0 %v784
    %1348 = vmatprep.subr.mxu0 0.0
    %1349 = vmatpush1.msra.mxu0 %v783
    %1350 = vmatprep.subr.mxu0 0.0
    %1351 = vmatpush1.msra.mxu0 %v782
    %1352 = vmatprep.subr.mxu0 0.0
    %1353 = vmatpush1.msra.mxu0 %v781
    %1354 = vmatprep.subr.mxu0 0.0
    %1355 = vmatpush1.msra.mxu0 %v780
    %1356 = vmatprep.subr.mxu0 0.0
    %1357 = vmatpush1.msra.mxu0 %v779
    %1358 = vmatprep.subr.mxu0 0.0
    %1359 = vmatpush1.msra.mxu0 %v778
    %1360 = vmatprep.subr.mxu0 0.0
    %1361 = vmatpush1.msra.mxu0 %v777
    %1362 = vmatprep.subr.mxu0 0.0
    %1363 = vmatpush1.msra.mxu0 %v776
    %1364 = vmatprep.subr.mxu0 0.0
    %1365 = vmatpush1.msra.mxu0 %v775
    %1366 = vmatprep.subr.mxu0 0.0
    %1367 = vmatpush1.msra.mxu0 %v774
    %1368 = vmatprep.subr.mxu0 0.0
    %1369 = vmatpush1.msra.mxu0 %v773
    %1370 = vmatprep.subr.mxu0 0.0
    %1371 = vmatpush1.msra.mxu0 %v772
    %1372 = vmatprep.subr.mxu0 0.0
    %1373 = vmatpush1.msra.mxu0 %v771
    %1374 = vmatprep.subr.mxu0 0.0
    %1375 = vmatpush1.msra.mxu0 %v770
    %1376 = vmatprep.subr.mxu0 0.0
    %1377 = vmatpush1.msra.mxu0 %v769
    %1378 = vmatprep.subr.mxu0 0.0
    %1379 = vmatpush2.msra.mxu0 %v800
    %1380 = vmatprep.subr.mxu0 0.0
    %1381 = vmatpush2.msra.mxu0 %v799
    %1382 = vmatprep.subr.mxu0 0.0
    %1383 = vmatpush2.msra.mxu0 %v798
    %1384 = vmatprep.subr.mxu0 0.0
    %1385 = vmatpush2.msra.mxu0 %v797
    %1386 = vmatprep.subr.mxu0 0.0
    %1387 = vmatpush2.msra.mxu0 %v796
    %1388 = vmatprep.subr.mxu0 0.0
    %1389 = vmatpush2.msra.mxu0 %v795
    %1390 = vmatprep.subr.mxu0 0.0
    %1391 = vmatpush2.msra.mxu0 %v794
    %1392 = vmatprep.subr.mxu0 0.0
    %1393 = vmatpush2.msra.mxu0 %v793
    %1394 = vmatprep.subr.mxu0 0.0
    %1395 = vmatpush2.msra.mxu0 %v792
    %1396 = vmatprep.subr.mxu0 0.0
    %1397 = vmatpush2.msra.mxu0 %v791
    %1398 = vmatprep.subr.mxu0 0.0
    %1399 = vmatpush2.msra.mxu0 %v790
    %1400 = vmatprep.subr.mxu0 0.0
    %1401 = vmatpush2.msra.mxu0 %v789
    %1402 = vmatprep.subr.mxu0 0.0
    %1403 = vmatpush2.msra.mxu0 %v788
    %1404 = vmatprep.subr.mxu0 0.0
    %1405 = vmatpush2.msra.mxu0 %v787
    %1406 = vmatprep.subr.mxu0 0.0
    %1407 = vmatpush2.msra.mxu0 %v786
    %1408 = vmatprep.subr.mxu0 0.0
    %1409 = vmatpush2.msra.mxu0 %v785
    %1410 = vmatprep.mubr.f32.mxu0 %v804
    %1411 = vmatmul.mubr.f32.gmra.mxu0 %v803
    %v1412 = vpop.f32.mrf.mxu0
    %v1413 = vadd.f32 %v1188, %v1412
    %v1414 = vpop.f32.mrf.mxu0
    %1415 = vmatprep.mubr.f32.mxu0 %v808
    %1416 = vmatmul.mubr.f32.gmra.mxu0 %v807
    %v1417 = vpop.f32.mrf.mxu0
    %v1418 = vadd.f32 %v1193, %v1417
    %v1419 = vpop.f32.mrf.mxu0
    %1420 = vmatprep.mubr.f32.mxu0 %v812
    %1421 = vmatmul.mubr.f32.gmra.mxu0 %v811
    %v1422 = vpop.f32.mrf.mxu0
    %v1423 = vadd.f32 %v1198, %v1422
    %v1424 = vpop.f32.mrf.mxu0
    %1425 = vmatprep.mubr.f32.mxu0 %v816
    %1426 = vmatmul.mubr.f32.gmra.mxu0 %v815
    %v1427 = vpop.f32.mrf.mxu0
    %v1428 = vadd.f32 %v1203, %v1427
    %v1429 = vpop.f32.mrf.mxu0
    %1430 = vmatprep.mubr.f32.mxu0 %v820
    %1431 = vmatmul.mubr.f32.gmra.mxu0 %v819
    %v1432 = vpop.f32.mrf.mxu0
    %v1433 = vadd.f32 %v1208, %v1432
    %v1434 = vpop.f32.mrf.mxu0
    %1435 = vmatprep.mubr.f32.mxu0 %v824
    %1436 = vmatmul.mubr.f32.gmra.mxu0 %v823
    %v1437 = vpop.f32.mrf.mxu0
    %v1438 = vadd.f32 %v1213, %v1437
    %v1439 = vpop.f32.mrf.mxu0
    %1440 = vmatprep.mubr.f32.mxu0 %v828
    %1441 = vmatmul.mubr.f32.gmra.mxu0 %v827
    %v1442 = vpop.f32.mrf.mxu0
    %v1443 = vadd.f32 %v1218, %v1442
    %v1444 = vpop.f32.mrf.mxu0
    %1445 = vmatprep.mubr.f32.mxu0 %v832
    %1446 = vmatmul.mubr.f32.gmra.mxu0 %v831
    %v1447 = vpop.f32.mrf.mxu0
    %v1448 = vadd.f32 %v1223, %v1447
    %v1449 = vpop.f32.mrf.mxu0
    %1450 = vmatprep.mubr.f32.mxu0 %v836
    %1451 = vmatmul.mubr.f32.gmra.mxu0 %v835
    %v1452 = vpop.f32.mrf.mxu0
    %v1453 = vadd.f32 %v1228, %v1452
    %v1454 = vpop.f32.mrf.mxu0
    %1455 = vmatprep.mubr.f32.mxu0 %v840
    %1456 = vmatmul.mubr.f32.gmra.mxu0 %v839
    %v1457 = vpop.f32.mrf.mxu0
    %v1458 = vadd.f32 %v1233, %v1457
    %v1459 = vpop.f32.mrf.mxu0
    %1460 = vmatprep.mubr.f32.mxu0 %v844
    %1461 = vmatmul.mubr.f32.gmra.mxu0 %v843
    %v1462 = vpop.f32.mrf.mxu0
    %v1463 = vadd.f32 %v1238, %v1462
    %v1464 = vpop.f32.mrf.mxu0
    %1465 = vmatprep.mubr.f32.mxu0 %v848
    %1466 = vmatmul.mubr.f32.gmra.mxu0 %v847
    %v1467 = vpop.f32.mrf.mxu0
    %v1468 = vadd.f32 %v1243, %v1467
    %v1469 = vpop.f32.mrf.mxu0
    %1470 = vmatprep.mubr.f32.mxu0 %v852
    %1471 = vmatmul.mubr.f32.gmra.mxu0 %v851
    %v1472 = vpop.f32.mrf.mxu0
    %v1473 = vadd.f32 %v1248, %v1472
    %v1474 = vpop.f32.mrf.mxu0
    %1475 = vmatprep.mubr.f32.mxu0 %v856
    %1476 = vmatmul.mubr.f32.gmra.mxu0 %v855
    %v1477 = vpop.f32.mrf.mxu0
    %v1478 = vadd.f32 %v1253, %v1477
    %v1479 = vpop.f32.mrf.mxu0
    %1480 = vmatprep.mubr.f32.mxu0 %v860
    %1481 = vmatmul.mubr.f32.gmra.mxu0 %v859
    %v1482 = vpop.f32.mrf.mxu0
    %v1483 = vadd.f32 %v1258, %v1482
    %v1484 = vpop.f32.mrf.mxu0
    %1485 = vmatprep.mubr.f32.mxu0 %v864
    %1486 = vmatmul.mubr.f32.gmra.mxu0 %v863
    %v1487 = vpop.f32.mrf.mxu0
    %v1488 = vadd.f32 %v1263, %v1487
    %v1489 = vpop.f32.mrf.mxu0
    %1490 = vmatprep.mubr.f32.mxu0 %v868
    %1491 = vmatmul.mubr.f32.gmra.mxu0 %v867
    %v1492 = vpop.f32.mrf.mxu0
    %v1493 = vadd.f32 %v1268, %v1492
    %v1494 = vpop.f32.mrf.mxu0
    %1495 = vmatprep.mubr.f32.mxu0 %v872
    %1496 = vmatmul.mubr.f32.gmra.mxu0 %v871
    %v1497 = vpop.f32.mrf.mxu0
    %v1498 = vadd.f32 %v1273, %v1497
    %v1499 = vpop.f32.mrf.mxu0
    %1500 = vmatprep.mubr.f32.mxu0 %v876
    %1501 = vmatmul.mubr.f32.gmra.mxu0 %v875
    %v1502 = vpop.f32.mrf.mxu0
    %v1503 = vadd.f32 %v1278, %v1502
    %v1504 = vpop.f32.mrf.mxu0
    %1505 = vmatprep.mubr.f32.mxu0 %v880
    %1506 = vmatmul.mubr.f32.gmra.mxu0 %v879
    %v1507 = vpop.f32.mrf.mxu0
    %v1508 = vadd.f32 %v1283, %v1507
    %v1509 = vpop.f32.mrf.mxu0
    %1510 = vmatprep.mubr.f32.mxu0 %v884
    %1511 = vmatmul.mubr.f32.gmra.mxu0 %v883
    %v1512 = vpop.f32.mrf.mxu0
    %v1513 = vadd.f32 %v1288, %v1512
    %v1514 = vpop.f32.mrf.mxu0
    %1515 = vmatprep.mubr.f32.mxu0 %v888
    %1516 = vmatmul.mubr.f32.gmra.mxu0 %v887
    %v1517 = vpop.f32.mrf.mxu0
    %v1518 = vadd.f32 %v1293, %v1517
    %v1519 = vpop.f32.mrf.mxu0
    %1520 = vmatprep.mubr.f32.mxu0 %v892
    %1521 = vmatmul.mubr.f32.gmra.mxu0 %v891
    %v1522 = vpop.f32.mrf.mxu0
    %v1523 = vadd.f32 %v1298, %v1522
    %v1524 = vpop.f32.mrf.mxu0
    %1525 = vmatprep.mubr.f32.mxu0 %v896
    %1526 = vmatmul.mubr.f32.gmra.mxu0 %v895
    %v1527 = vpop.f32.mrf.mxu0
    %v1528 = vadd.f32 %v1303, %v1527
    %v1529 = vpop.f32.mrf.mxu0
    %1530 = vmatprep.mubr.f32.mxu0 %v900
    %1531 = vmatmul.mubr.f32.gmra.mxu0 %v899
    %v1532 = vpop.f32.mrf.mxu0
    %v1533 = vadd.f32 %v1308, %v1532
    %v1534 = vpop.f32.mrf.mxu0
    %1535 = vmatprep.mubr.f32.mxu0 %v904
    %1536 = vmatmul.mubr.f32.gmra.mxu0 %v903
    %v1537 = vpop.f32.mrf.mxu0
    %v1538 = vadd.f32 %v1313, %v1537
    %v1539 = vpop.f32.mrf.mxu0
    %1540 = vmatprep.mubr.f32.mxu0 %v908
    %1541 = vmatmul.mubr.f32.gmra.mxu0 %v907
    %v1542 = vpop.f32.mrf.mxu0
    %v1543 = vadd.f32 %v1318, %v1542
    %v1544 = vpop.f32.mrf.mxu0
    %1545 = vmatprep.mubr.f32.mxu0 %v912
    %1546 = vmatmul.mubr.f32.gmra.mxu0 %v911
    %v1547 = vpop.f32.mrf.mxu0
    %v1548 = vadd.f32 %v1323, %v1547
    %v1549 = vpop.f32.mrf.mxu0
    %1550 = vmatprep.mubr.f32.mxu0 %v916
    %1551 = vmatmul.mubr.f32.gmra.mxu0 %v915
    %v1552 = vpop.f32.mrf.mxu0
    %v1553 = vadd.f32 %v1328, %v1552
    %v1554 = vpop.f32.mrf.mxu0
    %1555 = vmatprep.mubr.f32.mxu0 %v920
    %1556 = vmatmul.mubr.f32.gmra.mxu0 %v919
    %v1557 = vpop.f32.mrf.mxu0
    %v1558 = vadd.f32 %v1333, %v1557
    %v1559 = vpop.f32.mrf.mxu0
    %1560 = vmatprep.mubr.f32.mxu0 %v924
    %1561 = vmatmul.mubr.f32.gmra.mxu0 %v923
    %v1562 = vpop.f32.mrf.mxu0
    %v1563 = vadd.f32 %v1338, %v1562
    %v1564 = vpop.f32.mrf.mxu0
    %1565 = vmatprep.mubr.f32.mxu0 %v928
    %1566 = vmatmul.mubr.f32.gmra.mxu0 %v927
    %v1567 = vpop.f32.mrf.mxu0
    %v1568 = vadd.f32 %v1343, %v1567
    %v1569 = vpop.f32.mrf.mxu0
    %1570 = vdwg.mxu0
    %v1571 = vmul.f32 %v1413, 0.2
    %v1572 = vmul.f32 %v1418, 0.2
    %v1573 = vmul.f32 %v1423, 0.2
    %v1574 = vmul.f32 %v1428, 0.2
    %v1575 = vmul.f32 %v1433, 0.2
    %v1576 = vmul.f32 %v1438, 0.2
    %v1577 = vmul.f32 %v1443, 0.2
    %v1578 = vmul.f32 %v1448, 0.2
    %v1579 = vmul.f32 %v1453, 0.2
    %v1580 = vmul.f32 %v1458, 0.2
    %v1581 = vmul.f32 %v1463, 0.2
    %v1582 = vmul.f32 %v1468, 0.2
    %v1583 = vmul.f32 %v1473, 0.2
    %v1584 = vmul.f32 %v1478, 0.2
    %v1585 = vmul.f32 %v1483, 0.2
    %v1586 = vmul.f32 %v1488, 0.2
    %v1587 = vmul.f32 %v1493, 0.2
    %v1588 = vmul.f32 %v1498, 0.2
    %v1589 = vmul.f32 %v1503, 0.2
    %v1590 = vmul.f32 %v1508, 0.2
    %v1591 = vmul.f32 %v1513, 0.2
    %v1592 = vmul.f32 %v1518, 0.2
    %v1593 = vmul.f32 %v1523, 0.2
    %v1594 = vmul.f32 %v1528, 0.2
    %v1595 = vmul.f32 %v1533, 0.2
    %v1596 = vmul.f32 %v1538, 0.2
    %v1597 = vmul.f32 %v1543, 0.2
    %v1598 = vmul.f32 %v1548, 0.2
    %v1599 = vmul.f32 %v1553, 0.2
    %v1600 = vmul.f32 %v1558, 0.2
    %v1601 = vmul.f32 %v1563, 0.2
    %v1602 = vmul.f32 %v1568, 0.2
    %v1603 = vmax.f32 %v1413, %v1571
    %v1604 = vmax.f32 %v1418, %v1572
    %v1605 = vmax.f32 %v1423, %v1573
    %v1606 = vmax.f32 %v1428, %v1574
    %v1607 = vmax.f32 %v1433, %v1575
    %v1608 = vmax.f32 %v1438, %v1576
    %v1609 = vmax.f32 %v1443, %v1577
    %v1610 = vmax.f32 %v1448, %v1578
    %v1611 = vmax.f32 %v1453, %v1579
    %v1612 = vmax.f32 %v1458, %v1580
    %v1613 = vmax.f32 %v1463, %v1581
    %v1614 = vmax.f32 %v1468, %v1582
    %v1615 = vmax.f32 %v1473, %v1583
    %v1616 = vmax.f32 %v1478, %v1584
    %v1617 = vmax.f32 %v1483, %v1585
    %v1618 = vmax.f32 %v1488, %v1586
    %v1619 = vmax.f32 %v1493, %v1587
    %v1620 = vmax.f32 %v1498, %v1588
    %v1621 = vmax.f32 %v1503, %v1589
    %v1622 = vmax.f32 %v1508, %v1590
    %v1623 = vmax.f32 %v1513, %v1591
    %v1624 = vmax.f32 %v1518, %v1592
    %v1625 = vmax.f32 %v1523, %v1593
    %v1626 = vmax.f32 %v1528, %v1594
    %v1627 = vmax.f32 %v1533, %v1595
    %v1628 = vmax.f32 %v1538, %v1596
    %v1629 = vmax.f32 %v1543, %v1597
    %v1630 = vmax.f32 %v1548, %v1598
    %v1631 = vmax.f32 %v1553, %v1599
    %v1632 = vmax.f32 %v1558, %v1600
    %v1633 = vmax.f32 %v1563, %v1601
    %v1634 = vmax.f32 %v1568, %v1602
    %v1635 = vld [vmem:[%s4] sm:$0x3]
    %v1636 = vld [vmem:[#allocation2] sm:$0x1]
    %1638 = vset.pattern.permute.xlu0 0
    %1639 = vperm.xlu0 %1638, %v1636
    %v1640 = vpop.permute.xlu0 %1639
    %v1642 = vlaneseq
    %v1643 = vshrl.u32 %v1642, 7
    %v1644 = vsub.s32 0, %v1643
    %v1645 = vrot.slane %v1640, %v1644
    %v1647 = vlaneseq
    %v1648 = vshrl.u32 %v1647, 7
    %v1649 = vsub.s32 0, %v1648
    %v1650 = vrot.slane %v1635, %v1649
    %v1651 = vlaneseq
    %v1652 = vshrl.u32 %v1651, 7
    %v1653 = vsub.s32 1, %v1652
    %v1654 = vrot.slane %v1635, %v1653
    %1657 = vmatprep.subr.mxu0 0.0
    %1658 = vmatpush1.msra.mxu0 %v1618
    %1659 = vmatprep.subr.mxu0 0.0
    %1660 = vmatpush1.msra.mxu0 %v1617
    %1661 = vmatprep.subr.mxu0 0.0
    %1662 = vmatpush1.msra.mxu0 %v1616
    %1663 = vmatprep.subr.mxu0 0.0
    %1664 = vmatpush1.msra.mxu0 %v1615
    %1665 = vmatprep.subr.mxu0 0.0
    %1666 = vmatpush1.msra.mxu0 %v1614
    %1667 = vmatprep.subr.mxu0 0.0
    %1668 = vmatpush1.msra.mxu0 %v1613
    %1669 = vmatprep.subr.mxu0 0.0
    %1670 = vmatpush1.msra.mxu0 %v1612
    %1671 = vmatprep.subr.mxu0 0.0
    %1672 = vmatpush1.msra.mxu0 %v1611
    %1673 = vmatprep.subr.mxu0 0.0
    %1674 = vmatpush1.msra.mxu0 %v1610
    %1675 = vmatprep.subr.mxu0 0.0
    %1676 = vmatpush1.msra.mxu0 %v1609
    %1677 = vmatprep.subr.mxu0 0.0
    %1678 = vmatpush1.msra.mxu0 %v1608
    %1679 = vmatprep.subr.mxu0 0.0
    %1680 = vmatpush1.msra.mxu0 %v1607
    %1681 = vmatprep.subr.mxu0 0.0
    %1682 = vmatpush1.msra.mxu0 %v1606
    %1683 = vmatprep.subr.mxu0 0.0
    %1684 = vmatpush1.msra.mxu0 %v1605
    %1685 = vmatprep.subr.mxu0 0.0
    %1686 = vmatpush1.msra.mxu0 %v1604
    %1687 = vmatprep.subr.mxu0 0.0
    %1688 = vmatpush1.msra.mxu0 %v1603
    %1689 = vmatprep.subr.mxu0 0.0
    %1690 = vmatpush2.msra.mxu0 %v1634
    %1691 = vmatprep.subr.mxu0 0.0
    %1692 = vmatpush2.msra.mxu0 %v1633
    %1693 = vmatprep.subr.mxu0 0.0
    %1694 = vmatpush2.msra.mxu0 %v1632
    %1695 = vmatprep.subr.mxu0 0.0
    %1696 = vmatpush2.msra.mxu0 %v1631
    %1697 = vmatprep.subr.mxu0 0.0
    %1698 = vmatpush2.msra.mxu0 %v1630
    %1699 = vmatprep.subr.mxu0 0.0
    %1700 = vmatpush2.msra.mxu0 %v1629
    %1701 = vmatprep.subr.mxu0 0.0
    %1702 = vmatpush2.msra.mxu0 %v1628
    %1703 = vmatprep.subr.mxu0 0.0
    %1704 = vmatpush2.msra.mxu0 %v1627
    %1705 = vmatprep.subr.mxu0 0.0
    %1706 = vmatpush2.msra.mxu0 %v1626
    %1707 = vmatprep.subr.mxu0 0.0
    %1708 = vmatpush2.msra.mxu0 %v1625
    %1709 = vmatprep.subr.mxu0 0.0
    %1710 = vmatpush2.msra.mxu0 %v1624
    %1711 = vmatprep.subr.mxu0 0.0
    %1712 = vmatpush2.msra.mxu0 %v1623
    %1713 = vmatprep.subr.mxu0 0.0
    %1714 = vmatpush2.msra.mxu0 %v1622
    %1715 = vmatprep.subr.mxu0 0.0
    %1716 = vmatpush2.msra.mxu0 %v1621
    %1717 = vmatprep.subr.mxu0 0.0
    %1718 = vmatpush2.msra.mxu0 %v1620
    %1719 = vmatprep.subr.mxu0 0.0
    %1720 = vmatpush2.msra.mxu0 %v1619
    %1721 = vmatprep.mubr.f32.mxu0 %v1654
    %1722 = vmatmul.mubr.f32.gmra.mxu0 %v1650
    %v1723 = vpop.f32.mrf.mxu0
    %v1724 = vadd.f32 %v1645, %v1723
    %v1725 = vpop.f32.mrf.mxu0
    %1726 = vdwg.mxu0
    %v1727 = vsub.f32 0.0, %v1724
    %v1728 = vmul.f32 %v1727, 1.442695
    %v1729 = vpow.pop %v1728
    %v1730 = vadd.f32 %v1729, 1.0
    %v1731 = vrcp.pop %v1730
    %v1732 = vmul.f32 1.0, %v1731
    %1733 = vst [vmem:[#allocation3] sm:$0x1] %v1732
    // Predicated region
    $region26: #{discriminator_forward.1} parent=1 // pred_check
      _
    $region27: #{discriminator_forward.1} parent=1 // pred_check_branch
      %1735 = sbr.rel (0) target = $region29
    $region28: #{discriminator_forward.1} parent=1 // pred_region
      %s1737 = ssub.s32 16, 16
      %1738 = vsyncadd [#allocation4], %s1737
      %s1740 = sshll.u32 [#allocation3], 4
      %s1741 = int_to_ptr.vmem [resolvable:$true] %s1740
      %1743 = dma.vmem_to_hbm [thread:$0]  %s1741, 16, %s6, [#allocation4]
    $region29: #{discriminator_forward.1} parent=1 // pred_fallthru
      _
    // Predicated region
    $region30: #{discriminator_forward.1} parent=1 // pred_check
      _
    $region31: #{discriminator_forward.1} parent=1 // pred_check_branch
      %1745 = sbr.rel (0) target = $region33
    $region32: #{discriminator_forward.1} parent=1 // pred_region
      %1746 = dma.done [#allocation4], 16
    $region33: #{discriminator_forward.1} parent=1 // pred_fallthru
      _
    %1747 = vsyncpa [#allocation4], 1

</llo_original>
